<compile_context>
chip_gen: v7x
topology: tpu7x:2x2x1
jax: 0.10.0
libtpu: 0.0.40
codegen_flags: <defaults>
</compile_context>

<pallas_src>
import functools

import jax
import jax.numpy as jnp
from jax.experimental import pallas as pl
from jax.experimental.pallas import tpu as pltpu


def _round_up(x, m):
    return (x + m - 1) // m * m


def _mlp_kernel(*refs):
    """refs = (x_ref, W0, b0, W1, b1, ..., Wproj, bproj, o_ref, h_scratch).

    Fused forward pass for one row tile.  x/W are bf16 (MXU native), accumulation and
    sigmoid are f32, the hidden activation is staged through a reused bf16 VMEM scratch.
    """
    x_ref = refs[0]
    o_ref = refs[-2]
    h_ref = refs[-1]                      # reused (tile_rows, hidden_pad) bf16 staging buffer
    wb = refs[1:-2]                       # alternating (weight, bias) refs
    n_pairs = len(wb) // 2

    # transform_to_hidden: Linear, no activation.
    acc = jnp.dot(x_ref[...], wb[0][...], preferred_element_type=jnp.float32)
    acc = acc + wb[1][...]

    # hidden transform layers: Linear -> Sigmoid -> Dropout (identity at inference).
    # TODO(synk): training-mode dropout (stochastic masking) not implemented; eval semantics only.
    for i in range(1, n_pairs - 1):
        h_ref[...] = acc.astype(jnp.bfloat16)
        acc = jnp.dot(h_ref[...], wb[2 * i][...], preferred_element_type=jnp.float32)
        acc = acc + wb[2 * i + 1][...]
        # sigmoid(x) = 1 / (1 + exp(-x)): both the transcendental and the divide stay in the
        # otherwise-idle EUP slot (approx reciprocal) instead of a full-precision VPU divide.
        acc = pl.reciprocal(1.0 + jnp.exp(-acc), approx=True)

    # projection (no activation).
    h_ref[...] = acc.astype(jnp.bfloat16)
    out = jnp.dot(h_ref[...], wb[-2][...], preferred_element_type=jnp.float32)
    out = out + wb[-1][...]
    o_ref[...] = out.astype(o_ref.dtype)


def prepare_params(params, *, lane_align=128):
    """Pad feature dims to lane_align and cast weights to bf16 ONCE (hoisted out of forward).

    Zero padding is exact: padded input features hit zero weight rows, padded hidden lanes
    (sigmoid(0)=0.5) hit zero weight rows of the next layer, padded output lanes are sliced off.
    NOTE: on v6e/v7x the MXU is 2x256x256; when the real dims are small, lane_align=256 keeps
    the systolic array full (real-model dims 768/2304 are already multiples of 256).
    TODO(synk): optional int8 weight path (per-channel scales) for v5e/v6e; v7x MXU is fp8-only.
    """
    padded = []
    for w, b in params:
        din, dout = w.shape
        din_p, dout_p = _round_up(din, lane_align), _round_up(dout, lane_align)
        w_p = jnp.pad(w, ((0, din_p - din), (0, dout_p - dout))).astype(jnp.bfloat16)
        b_p = jnp.pad(b, (0, dout_p - dout)).reshape(1, -1).astype(jnp.float32)
        padded.append((w_p, b_p))
    return padded


def _vmem_capacity_bytes():
    try:
        return int(pltpu.get_tpu_info().vmem_capacity_bytes)
    except Exception:
        return 64 * 1024 * 1024   # conservative fallback = v7x per-TC physical VMEM


def sliding_classifier_forward(x, padded_params, *, num_codes=None, tile_rows=None,
                               out_dtype=jnp.bfloat16):
    """x: (N, input_size) float32.  padded_params: output of prepare_params (bf16, lane-padded)."""
    n_rows, input_size = x.shape
    in_pad, hidden_pad = padded_params[0][0].shape
    codes_pad = padded_params[-1][0].shape[1]
    out_itemsize = jnp.dtype(out_dtype).itemsize

    # ---- device-aware row tile + VMEM budget -----------------------------------
    vmem_cap = _vmem_capacity_bytes()
    budget = int(0.85 * vmem_cap)                       # never request more than ~85% of VMEM
    if tile_rows is None:
        # Bigger row tiles on the 128 MiB parts (v5e/v6e); 512 on the 64 MiB part (v7x).
        tile_rows = 1024 if vmem_cap >= 96 * 1024 * 1024 else 512
    # v7x megacore: guarantee >= 2 row tiles so ("parallel",) can shard across both TCs.
    tile_rows = min(_round_up(int(tile_rows), 8), max(8, _round_up(pl.cdiv(n_rows, 2), 8)))
    tile_rows = max(8, tile_rows)

    weight_bytes = sum(w.size * w.dtype.itemsize + b.size * b.dtype.itemsize
                       for w, b in padded_params)

    def working_set(tile):
        act_in = 2 * tile * in_pad * 2                        # bf16 input, double-buffered
        act_out = 2 * tile * codes_pad * out_itemsize         # output, double-buffered
        h_scratch = tile * hidden_pad * 2                     # reused bf16 staging buffer
        acc = 2 * tile * max(hidden_pad, codes_pad) * 4       # f32 accumulator headroom
        return weight_bytes + act_in + act_out + h_scratch + acc

    while working_set(tile_rows) > budget and tile_rows > 8:  # auto-shrink instead of OOM
        tile_rows = max(8, _round_up(tile_rows // 2, 8))
    vmem_limit = int(min(budget, max(working_set(tile_rows) + (4 << 20), 32 << 20)))

    # ---- input: bf16 cast first (halves the pad copy), lane padding only -------
    # Rows stay ragged; the last partial row tile is handled by masked OOB stores in-kernel,
    # so there is no HBM row-padding pass and no row slice on the output.
    x_b = x.astype(jnp.bfloat16)
    if in_pad != input_size:
        x_b = jnp.pad(x_b, ((0, 0), (0, in_pad - input_size)))

    grid = (pl.cdiv(n_rows, tile_rows),)

    flat_args = [x_b]
    in_specs = [pl.BlockSpec((tile_rows, in_pad), lambda i: (i, 0))]
    for w_p, b_p in padded_params:
        flat_args += [w_p, b_p]
        # Grid-invariant blocks -> single-buffer them (halves their VMEM footprint).
        in_specs += [
            pl.BlockSpec(w_p.shape, lambda i: (0, 0), pipeline_mode=pl.Buffered(1)),
            pl.BlockSpec(b_p.shape, lambda i: (0, 0), pipeline_mode=pl.Buffered(1)),
        ]
    out_spec = pl.BlockSpec((tile_rows, codes_pad), lambda i: (i, 0))

    out_padded = pl.pallas_call(
        _mlp_kernel,
        out_shape=jax.ShapeDtypeStruct((n_rows, codes_pad), out_dtype),
        grid_spec=pltpu.PrefetchScalarGridSpec(
            num_scalar_prefetch=0,
            grid=grid,
            in_specs=in_specs,
            out_specs=out_spec,
            scratch_shapes=[pltpu.VMEM((tile_rows, hidden_pad), jnp.bfloat16)],
        ),
        compiler_params=pltpu.CompilerParams(
            dimension_semantics=("parallel",),   # shard row tiles across TCs (v7x megacore)
            vmem_limit_bytes=vmem_limit,
        ),
    )(*flat_args)

    # TODO(synk): if num_codes/hidden scale up (codes_pad*tile_rows f32 accumulator pressuring
    # v7x's 64 MiB VMEM), split into two pallas_calls: fused MLP -> bf16 h, then a
    # (row x code)-tiled projection matmul, instead of a codes grid axis on this fused kernel.
    if num_codes is None or num_codes == codes_pad:
        return out_padded
    # TODO(synk): fuse this lane slice into the consumer when it can take the padded slab.
    return out_padded[:, :num_codes]


def init_params(key, num_layers, hidden_size, input_size, num_codes):
    """Deterministic synthetic parameters. Weights stored as (in, out) = torch weight.T."""
    params = []
    dims = [(input_size, hidden_size)]
    dims += [(hidden_size, hidden_size)] * num_layers
    dims += [(hidden_size, num_codes)]
    for (din, dout) in dims:
        key, kw, kb = jax.random.split(key, 3)
        w = jax.random.normal(kw, (din, dout), jnp.float32) * 0.05
        b = jax.random.normal(kb, (dout,), jnp.float32) * 0.05
        params.append((w, b))
    return params


def reference_forward(x, params):
    """Plain-JAX f32 reference of the PyTorch module (eval mode)."""
    w, b = params[0]
    h = x @ w + b
    for (w, b) in params[1:-1]:
        h = jax.nn.sigmoid(h @ w + b)
    w, b = params[-1]
    return h @ w + b


if __name__ == "__main__":
    # Small shapes consistent with the module (batch*seq rows -> hidden MLP -> code logits).
    batch, seq = 2, 100          # 200 rows: exercises ragged row tiling + a multi-step grid
    input_size = 32              # stands in for 768
    hidden_size = 32
    num_codes = 200              # stands in for 2292 (non-multiple of 128 -> padded to 256)
    num_layers = 2
    dropout_p = 0.1              # unused at inference

    key = jax.random.PRNGKey(0)
    key, kx = jax.random.split(key)
    x = jax.random.normal(kx, (batch * seq, input_size), jnp.float32)

    params = init_params(key, num_layers, hidden_size, input_size, num_codes)
    # Hoisted: pad + bf16-cast the weights once, not on every forward call.
    padded_params = prepare_params(params)

    fwd = jax.jit(functools.partial(sliding_classifier_forward,
                                    num_codes=num_codes, out_dtype=jnp.bfloat16))
    out = fwd(x, padded_params)
    out = jax.block_until_ready(out)

    ref = reference_forward(x, params)
    assert out.shape == (batch * seq, num_codes)
    assert out.dtype == jnp.bfloat16
    # bf16 matmuls + bf16 output with f32 accumulation: tolerance loosened vs pure-f32 reference.
    err = jnp.max(jnp.abs(out.astype(jnp.float32) - ref))
    assert jnp.allclose(out.astype(jnp.float32), ref, atol=3e-2, rtol=3e-2), f"mismatch {err}"

    print("KERNEL_OK")
</pallas_src>

<mosaic_0001>
module attributes {stable_mosaic.version = 11 : i64} {
  func.func @_mlp_kernel(%arg0: i32, %arg1: memref<104x128xbf16, #tpu.memory_space<vmem>>, %arg2: memref<128x128xbf16, #tpu.memory_space<vmem>>, %arg3: memref<1x128xf32, #tpu.memory_space<vmem>>, %arg4: memref<128x128xbf16, #tpu.memory_space<vmem>>, %arg5: memref<1x128xf32, #tpu.memory_space<vmem>>, %arg6: memref<128x128xbf16, #tpu.memory_space<vmem>>, %arg7: memref<1x128xf32, #tpu.memory_space<vmem>>, %arg8: memref<128x256xbf16, #tpu.memory_space<vmem>>, %arg9: memref<1x256xf32, #tpu.memory_space<vmem>>, %arg10: memref<104x256xbf16, #tpu.memory_space<vmem>>, %arg11: memref<104x128xbf16, #tpu.memory_space<vmem>>) attributes {dimension_semantics = [#tpu.dimension_semantics<parallel>], iteration_bounds = array<i64: 2>, scalar_prefetch = 0 : i64, scratch_operands = 1 : i64, tpu.core_type = #tpu.core_type<tc>, window_params = [{transform_indices = @transform_0, window_bounds = array<i64: 104, 128>}, {pipeline_mode = #tpu.pipeline_mode<synchronous>, transform_indices = @transform_1, window_bounds = array<i64: 128, 128>}, {pipeline_mode = #tpu.pipeline_mode<synchronous>, transform_indices = @transform_2, window_bounds = array<i64: 1, 128>}, {pipeline_mode = #tpu.pipeline_mode<synchronous>, transform_indices = @transform_3, window_bounds = array<i64: 128, 128>}, {pipeline_mode = #tpu.pipeline_mode<synchronous>, transform_indices = @transform_4, window_bounds = array<i64: 1, 128>}, {pipeline_mode = #tpu.pipeline_mode<synchronous>, transform_indices = @transform_5, window_bounds = array<i64: 128, 128>}, {pipeline_mode = #tpu.pipeline_mode<synchronous>, transform_indices = @transform_6, window_bounds = array<i64: 1, 128>}, {pipeline_mode = #tpu.pipeline_mode<synchronous>, transform_indices = @transform_7, window_bounds = array<i64: 128, 256>}, {pipeline_mode = #tpu.pipeline_mode<synchronous>, transform_indices = @transform_8, window_bounds = array<i64: 1, 256>}, {transform_indices = @transform_9, window_bounds = array<i64: 104, 256>}]} {
    %c0 = arith.constant 0 : index
    %c0_0 = arith.constant 0 : index
    %0 = vector.load %arg1[%c0, %c0_0] : memref<104x128xbf16, #tpu.memory_space<vmem>>, vector<104x128xbf16>
    %c0_1 = arith.constant 0 : index
    %c0_2 = arith.constant 0 : index
    %1 = vector.load %arg2[%c0_1, %c0_2] : memref<128x128xbf16, #tpu.memory_space<vmem>>, vector<128x128xbf16>
    %cst = arith.constant dense<0.000000e+00> : vector<104x128xf32>
    %2 = tpu.matmul %0, %1, %cst {dimension_numbers = #tpu.dot_dimension_numbers<[1], [0], [0], [1], [0, 0, 1, 1], [], []>} : vector<104x128xbf16>, vector<128x128xbf16>, vector<104x128xf32> -> vector<104x128xf32>
    %c0_3 = arith.constant 0 : index
    %c0_4 = arith.constant 0 : index
    %3 = vector.load %arg3[%c0_3, %c0_4] : memref<1x128xf32, #tpu.memory_space<vmem>>, vector<1x128xf32>
    %4 = vector.broadcast %3 : vector<1x128xf32> to vector<104x128xf32>
    %5 = arith.addf %2, %4 : vector<104x128xf32>
    %6 = arith.truncf %5 : vector<104x128xf32> to vector<104x128xbf16>
    %c0_5 = arith.constant 0 : index
    %c0_6 = arith.constant 0 : index
    %7 = vector.load %arg11[%c0_5, %c0_6] : memref<104x128xbf16, #tpu.memory_space<vmem>>, vector<104x128xbf16>
    tpu.vector_store %arg11[%c0_5, %c0_6], %6 {strides = array<i32>} : memref<104x128xbf16, #tpu.memory_space<vmem>>, vector<104x128xbf16>,
    %c0_7 = arith.constant 0 : index
    %c0_8 = arith.constant 0 : index
    %8 = vector.load %arg11[%c0_7, %c0_8] : memref<104x128xbf16, #tpu.memory_space<vmem>>, vector<104x128xbf16>
    %c0_9 = arith.constant 0 : index
    %c0_10 = arith.constant 0 : index
    %9 = vector.load %arg4[%c0_9, %c0_10] : memref<128x128xbf16, #tpu.memory_space<vmem>>, vector<128x128xbf16>
    %cst_11 = arith.constant dense<0.000000e+00> : vector<104x128xf32>
    %10 = tpu.matmul %8, %9, %cst_11 {dimension_numbers = #tpu.dot_dimension_numbers<[1], [0], [0], [1], [0, 0, 1, 1], [], []>} : vector<104x128xbf16>, vector<128x128xbf16>, vector<104x128xf32> -> vector<104x128xf32>
    %c0_12 = arith.constant 0 : index
    %c0_13 = arith.constant 0 : index
    %11 = vector.load %arg5[%c0_12, %c0_13] : memref<1x128xf32, #tpu.memory_space<vmem>>, vector<1x128xf32>
    %12 = vector.broadcast %11 : vector<1x128xf32> to vector<104x128xf32>
    %13 = arith.addf %10, %12 : vector<104x128xf32>
    %cst_14 = arith.constant 0.000000e+00 : f32
    %14 = vector.broadcast %cst_14 : f32 to vector<104x128xf32>
    %15 = arith.subf %14, %13 : vector<104x128xf32>
    %16 = math.exp %15 : vector<104x128xf32>
    %cst_15 = arith.constant 1.000000e+00 : f32
    %17 = vector.broadcast %cst_15 : f32 to vector<104x128xf32>
    %18 = arith.addf %17, %16 : vector<104x128xf32>
    %19 = tpu.reciprocal %18 {approx = true} : vector<104x128xf32> -> vector<104x128xf32>
    %20 = arith.truncf %19 : vector<104x128xf32> to vector<104x128xbf16>
    %c0_16 = arith.constant 0 : index
    %c0_17 = arith.constant 0 : index
    %21 = vector.load %arg11[%c0_16, %c0_17] : memref<104x128xbf16, #tpu.memory_space<vmem>>, vector<104x128xbf16>
    tpu.vector_store %arg11[%c0_16, %c0_17], %20 {strides = array<i32>} : memref<104x128xbf16, #tpu.memory_space<vmem>>, vector<104x128xbf16>,
    %c0_18 = arith.constant 0 : index
    %c0_19 = arith.constant 0 : index
    %22 = vector.load %arg11[%c0_18, %c0_19] : memref<104x128xbf16, #tpu.memory_space<vmem>>, vector<104x128xbf16>
    %c0_20 = arith.constant 0 : index
    %c0_21 = arith.constant 0 : index
    %23 = vector.load %arg6[%c0_20, %c0_21] : memref<128x128xbf16, #tpu.memory_space<vmem>>, vector<128x128xbf16>
    %cst_22 = arith.constant dense<0.000000e+00> : vector<104x128xf32>
    %24 = tpu.matmul %22, %23, %cst_22 {dimension_numbers = #tpu.dot_dimension_numbers<[1], [0], [0], [1], [0, 0, 1, 1], [], []>} : vector<104x128xbf16>, vector<128x128xbf16>, vector<104x128xf32> -> vector<104x128xf32>
    %c0_23 = arith.constant 0 : index
    %c0_24 = arith.constant 0 : index
    %25 = vector.load %arg7[%c0_23, %c0_24] : memref<1x128xf32, #tpu.memory_space<vmem>>, vector<1x128xf32>
    %26 = vector.broadcast %25 : vector<1x128xf32> to vector<104x128xf32>
    %27 = arith.addf %24, %26 : vector<104x128xf32>
    %cst_25 = arith.constant 0.000000e+00 : f32
    %28 = vector.broadcast %cst_25 : f32 to vector<104x128xf32>
    %29 = arith.subf %28, %27 : vector<104x128xf32>
    %30 = math.exp %29 : vector<104x128xf32>
    %cst_26 = arith.constant 1.000000e+00 : f32
    %31 = vector.broadcast %cst_26 : f32 to vector<104x128xf32>
    %32 = arith.addf %31, %30 : vector<104x128xf32>
    %33 = tpu.reciprocal %32 {approx = true} : vector<104x128xf32> -> vector<104x128xf32>
    %34 = arith.truncf %33 : vector<104x128xf32> to vector<104x128xbf16>
    %c0_27 = arith.constant 0 : index
    %c0_28 = arith.constant 0 : index
    %35 = vector.load %arg11[%c0_27, %c0_28] : memref<104x128xbf16, #tpu.memory_space<vmem>>, vector<104x128xbf16>
    tpu.vector_store %arg11[%c0_27, %c0_28], %34 {strides = array<i32>} : memref<104x128xbf16, #tpu.memory_space<vmem>>, vector<104x128xbf16>,
    %c0_29 = arith.constant 0 : index
    %c0_30 = arith.constant 0 : index
    %36 = vector.load %arg11[%c0_29, %c0_30] : memref<104x128xbf16, #tpu.memory_space<vmem>>, vector<104x128xbf16>
    %c0_31 = arith.constant 0 : index
    %c0_32 = arith.constant 0 : index
    %37 = vector.load %arg8[%c0_31, %c0_32] : memref<128x256xbf16, #tpu.memory_space<vmem>>, vector<128x256xbf16>
    %cst_33 = arith.constant dense<0.000000e+00> : vector<104x256xf32>
    %38 = tpu.matmul %36, %37, %cst_33 {dimension_numbers = #tpu.dot_dimension_numbers<[1], [0], [0], [1], [0, 0, 1, 1], [], []>} : vector<104x128xbf16>, vector<128x256xbf16>, vector<104x256xf32> -> vector<104x256xf32>
    %c0_34 = arith.constant 0 : index
    %c0_35 = arith.constant 0 : index
    %39 = vector.load %arg9[%c0_34, %c0_35] : memref<1x256xf32, #tpu.memory_space<vmem>>, vector<1x256xf32>
    %40 = vector.broadcast %39 : vector<1x256xf32> to vector<104x256xf32>
    %41 = arith.addf %38, %40 : vector<104x256xf32>
    %42 = arith.truncf %41 : vector<104x256xf32> to vector<104x256xbf16>
    %c0_36 = arith.constant 0 : index
    %c0_37 = arith.constant 0 : index
    %43 = vector.load %arg10[%c0_36, %c0_37] : memref<104x256xbf16, #tpu.memory_space<vmem>>, vector<104x256xbf16>
    tpu.vector_store %arg10[%c0_36, %c0_37], %42 {strides = array<i32>} : memref<104x256xbf16, #tpu.memory_space<vmem>>, vector<104x256xbf16>,
    return
  }
  func.func @transform_0(%arg0: i32) -> (i32, i32) {
    %c0_i32 = arith.constant 0 : i32
    %c0_i32_0 = arith.constant 0 : i32
    return %arg0, %c0_i32 : i32, i32
  }
  func.func @transform_1(%arg0: i32) -> (i32, i32) {
    %c0_i32 = arith.constant 0 : i32
    %c0_i32_0 = arith.constant 0 : i32
    %c0_i32_1 = arith.constant 0 : i32
    return %c0_i32, %c0_i32_0 : i32, i32
  }
  func.func @transform_2(%arg0: i32) -> (i32, i32) {
    %c0_i32 = arith.constant 0 : i32
    %c0_i32_0 = arith.constant 0 : i32
    %c0_i32_1 = arith.constant 0 : i32
    return %c0_i32, %c0_i32_0 : i32, i32
  }
  func.func @transform_3(%arg0: i32) -> (i32, i32) {
    %c0_i32 = arith.constant 0 : i32
    %c0_i32_0 = arith.constant 0 : i32
    %c0_i32_1 = arith.constant 0 : i32
    return %c0_i32, %c0_i32_0 : i32, i32
  }
  func.func @transform_4(%arg0: i32) -> (i32, i32) {
    %c0_i32 = arith.constant 0 : i32
    %c0_i32_0 = arith.constant 0 : i32
    %c0_i32_1 = arith.constant 0 : i32
    return %c0_i32, %c0_i32_0 : i32, i32
  }
  func.func @transform_5(%arg0: i32) -> (i32, i32) {
    %c0_i32 = arith.constant 0 : i32
    %c0_i32_0 = arith.constant 0 : i32
    %c0_i32_1 = arith.constant 0 : i32
    return %c0_i32, %c0_i32_0 : i32, i32
  }
  func.func @transform_6(%arg0: i32) -> (i32, i32) {
    %c0_i32 = arith.constant 0 : i32
    %c0_i32_0 = arith.constant 0 : i32
    %c0_i32_1 = arith.constant 0 : i32
    return %c0_i32, %c0_i32_0 : i32, i32
  }
  func.func @transform_7(%arg0: i32) -> (i32, i32) {
    %c0_i32 = arith.constant 0 : i32
    %c0_i32_0 = arith.constant 0 : i32
    %c0_i32_1 = arith.constant 0 : i32
    return %c0_i32, %c0_i32_0 : i32, i32
  }
  func.func @transform_8(%arg0: i32) -> (i32, i32) {
    %c0_i32 = arith.constant 0 : i32
    %c0_i32_0 = arith.constant 0 : i32
    %c0_i32_1 = arith.constant 0 : i32
    return %c0_i32, %c0_i32_0 : i32, i32
  }
  func.func @transform_9(%arg0: i32) -> (i32, i32) {
    %c0_i32 = arith.constant 0 : i32
    %c0_i32_0 = arith.constant 0 : i32
    return %arg0, %c0_i32 : i32, i32
  }
}

</mosaic_0001>

<llo_original>
// kernel: sliding_classifier_forward.1
$region0: #{sliding_classifier_forward.1}
  #allocation0 [shape = 'u32[]', space=smem, size = 0x4, offset = 0x4, fixed_abs, tag = 'smem constant byte address 0x4 - core index']
  #allocation1 [shape = 'u32[144,128]{1,0:T(1,128)}', space=vmem, size = 0x12000, scoped, tag = 'internal scratch']
  #allocation2 [shape = 'bf16[104,128]{1,0:T(8,128)(2,1)}', space=vmem, size = 0x6800, scoped, tag = 'scratch operand']
  %s0 = inlined_call_operand.vmem [shape: bf16[200,128], index: 0, kind: input, shape index: {}]
  %s1 = inlined_call_operand.vmem [shape: bf16[128,128], index: 1, kind: input, shape index: {}]
  %s2 = inlined_call_operand.vmem [shape: f32[1,128], index: 2, kind: input, shape index: {}]
  %s3 = inlined_call_operand.vmem [shape: bf16[128,128], index: 3, kind: input, shape index: {}]
  %s4 = inlined_call_operand.vmem [shape: f32[1,128], index: 4, kind: input, shape index: {}]
  %s5 = inlined_call_operand.vmem [shape: bf16[128,128], index: 5, kind: input, shape index: {}]
  %s6 = inlined_call_operand.vmem [shape: f32[1,128], index: 6, kind: input, shape index: {}]
  %s7 = inlined_call_operand.vmem [shape: bf16[128,256], index: 7, kind: input, shape index: {}]
  %s8 = inlined_call_operand.vmem [shape: f32[1,256], index: 8, kind: input, shape index: {}]
  %s9 = inlined_call_operand.hbm [shape: bf16[200,256], index: 9, kind: output, shape index: {}]
  %s10 = sld [smem:[#allocation0]]
  $region69: #{sliding_classifier_forward.1} parent=0
    _
  %s12 = ssub.s32 1, %s10
  %s13 = scalar_select 0, %s12, %s10
  $region1: #{sliding_classifier_forward.1} parent=0
    #allocation3 [shape = 'u8[106496]{0}', space=vmem, size = 0x1a000, scoped, tag = 'output window, operand 0']
    #allocation4 [shape = 's32[2]{0}', space=sflag, size = 0x8, scoped, tag = 'scoped memory for sliding_classifier_forward.1']
    %14 = vsyncpa [#allocation4], 0
    %s15 = scalar_lea.sflag [#allocation4], 1
    %16 = vsyncpa %s15, 0
    loop: start=0, step=1, limit=4
    $region2: #{sliding_classifier_forward.1} parent=1 // loop_pre_header
      _
    $region3: #{sliding_classifier_forward.1} parent=1 // loop_header
      %s18 = sphi 0, %s22
      %p19 = scmp.ge.s32.totalorder %s18, 4
      %s28 = sphi 0, %s30
      %s31 = sphi 0, %s28
      %s32 = sphi 0, %s31
      %s48 = sphi 0, %s32
      %s52 = sphi 0, %s52
      %s54 = sphi 0, %s52
      %s55 = sphi 0, %s54
      %s69 = sphi 0, %s55
      %s73 = sphi 0, %s73
      %s75 = sphi 0, %s73
      %s76 = sphi 0, %s75
      %s90 = sphi 0, %s76
      %s94 = sphi 0, %s94
      %s96 = sphi 0, %s94
      %s97 = sphi 0, %s96
      %s111 = sphi 0, %s97
      %s115 = sphi 0, %s115
      %s117 = sphi 0, %s115
      %s118 = sphi 0, %s117
      %s132 = sphi 0, %s118
      %s136 = sphi 0, %s136
      %s138 = sphi 0, %s136
      %s139 = sphi 0, %s138
      %s153 = sphi 0, %s139
      %s157 = sphi 0, %s157
      %s159 = sphi 0, %s157
      %s160 = sphi 0, %s159
      %s174 = sphi 0, %s160
      %s178 = sphi 0, %s178
      %s180 = sphi 0, %s178
      %s181 = sphi 0, %s180
      %s195 = sphi 0, %s181
      %s199 = sphi 0, %s199
      %s201 = sphi 0, %s199
      %s202 = sphi 0, %s201
      %s216 = sphi 0, %s202
      %s222 = sphi 0, %s224
      %s225 = sphi 0, %s222
      %s226 = sphi 0, %s225
      %s242 = sphi 0, %s226
    $region4: #{sliding_classifier_forward.1} parent=1 // loop_header_branch
      %21 = sbr.rel (%p19) target = $region8
    $region5: #{sliding_classifier_forward.1} parent=1 // loop_body
      %s23 = ssub.s32 %s18, 1
      %s24 = ssub.s32 %s18, 2
      %s25 = sadd.s32 %s18, 1
      %s26 = ssub.s32 %s18, %s25
      %p27 = scmp.eq.s32.totalorder %s26, 0
      %s29 = sadd.s32 %s28, 1
      %s30 = scalar_select %p27, %s28, %s29
      %p33 = pneg %p27
      %p34 = scmp.eq.s32.totalorder %s18, 1
      %p35 = por %p33, %p34
      %p36 = scmp.ne.s32.totalorder %s28, %s31
      %p37 = scmp.eq.s32.totalorder %s18, 0
      %p38 = por %p36, %p37
      %p39 = scmp.ne.s32.totalorder %s28, %s31
      %p40 = scmp.eq.s32.totalorder %s23, 1
      %p41 = por %p39, %p40
      %p42 = scmp.ne.s32.totalorder %s31, %s32
      %p43 = scmp.eq.s32.totalorder %s23, 0
      %p44 = por %p42, %p43
      %p45 = scmp.ne.s32.totalorder %s31, %s32
      %p46 = scmp.eq.s32.totalorder %s24, 1
      %p47 = por %p45, %p46
      %p49 = scmp.ne.s32.totalorder %s32, %s48
      %p50 = scmp.eq.s32.totalorder %s24, 0
      %p51 = por %p49, %p50
      %s53 = sadd.s32 %s52, 1
      %p56 = scmp.eq.s32.totalorder %s18, 1
      %p57 = scmp.ne.s32.totalorder %s52, %s54
      %p58 = scmp.eq.s32.totalorder %s18, 0
      %p59 = por %p57, %p58
      %p60 = scmp.ne.s32.totalorder %s52, %s54
      %p61 = scmp.eq.s32.totalorder %s23, 1
      %p62 = por %p60, %p61
      %p63 = scmp.ne.s32.totalorder %s54, %s55
      %p64 = scmp.eq.s32.totalorder %s23, 0
      %p65 = por %p63, %p64
      %p66 = scmp.ne.s32.totalorder %s54, %s55
      %p67 = scmp.eq.s32.totalorder %s24, 1
      %p68 = por %p66, %p67
      %p70 = scmp.ne.s32.totalorder %s55, %s69
      %p71 = scmp.eq.s32.totalorder %s24, 0
      %p72 = por %p70, %p71
      %s74 = sadd.s32 %s73, 1
      %p77 = scmp.eq.s32.totalorder %s18, 1
      %p78 = scmp.ne.s32.totalorder %s73, %s75
      %p79 = scmp.eq.s32.totalorder %s18, 0
      %p80 = por %p78, %p79
      %p81 = scmp.ne.s32.totalorder %s73, %s75
      %p82 = scmp.eq.s32.totalorder %s23, 1
      %p83 = por %p81, %p82
      %p84 = scmp.ne.s32.totalorder %s75, %s76
      %p85 = scmp.eq.s32.totalorder %s23, 0
      %p86 = por %p84, %p85
      %p87 = scmp.ne.s32.totalorder %s75, %s76
      %p88 = scmp.eq.s32.totalorder %s24, 1
      %p89 = por %p87, %p88
      %p91 = scmp.ne.s32.totalorder %s76, %s90
      %p92 = scmp.eq.s32.totalorder %s24, 0
      %p93 = por %p91, %p92
      %s95 = sadd.s32 %s94, 1
      %p98 = scmp.eq.s32.totalorder %s18, 1
      %p99 = scmp.ne.s32.totalorder %s94, %s96
      %p100 = scmp.eq.s32.totalorder %s18, 0
      %p101 = por %p99, %p100
      %p102 = scmp.ne.s32.totalorder %s94, %s96
      %p103 = scmp.eq.s32.totalorder %s23, 1
      %p104 = por %p102, %p103
      %p105 = scmp.ne.s32.totalorder %s96, %s97
      %p106 = scmp.eq.s32.totalorder %s23, 0
      %p107 = por %p105, %p106
      %p108 = scmp.ne.s32.totalorder %s96, %s97
      %p109 = scmp.eq.s32.totalorder %s24, 1
      %p110 = por %p108, %p109
      %p112 = scmp.ne.s32.totalorder %s97, %s111
      %p113 = scmp.eq.s32.totalorder %s24, 0
      %p114 = por %p112, %p113
      %s116 = sadd.s32 %s115, 1
      %p119 = scmp.eq.s32.totalorder %s18, 1
      %p120 = scmp.ne.s32.totalorder %s115, %s117
      %p121 = scmp.eq.s32.totalorder %s18, 0
      %p122 = por %p120, %p121
      %p123 = scmp.ne.s32.totalorder %s115, %s117
      %p124 = scmp.eq.s32.totalorder %s23, 1
      %p125 = por %p123, %p124
      %p126 = scmp.ne.s32.totalorder %s117, %s118
      %p127 = scmp.eq.s32.totalorder %s23, 0
      %p128 = por %p126, %p127
      %p129 = scmp.ne.s32.totalorder %s117, %s118
      %p130 = scmp.eq.s32.totalorder %s24, 1
      %p131 = por %p129, %p130
      %p133 = scmp.ne.s32.totalorder %s118, %s132
      %p134 = scmp.eq.s32.totalorder %s24, 0
      %p135 = por %p133, %p134
      %s137 = sadd.s32 %s136, 1
      %p140 = scmp.eq.s32.totalorder %s18, 1
      %p141 = scmp.ne.s32.totalorder %s136, %s138
      %p142 = scmp.eq.s32.totalorder %s18, 0
      %p143 = por %p141, %p142
      %p144 = scmp.ne.s32.totalorder %s136, %s138
      %p145 = scmp.eq.s32.totalorder %s23, 1
      %p146 = por %p144, %p145
      %p147 = scmp.ne.s32.totalorder %s138, %s139
      %p148 = scmp.eq.s32.totalorder %s23, 0
      %p149 = por %p147, %p148
      %p150 = scmp.ne.s32.totalorder %s138, %s139
      %p151 = scmp.eq.s32.totalorder %s24, 1
      %p152 = por %p150, %p151
      %p154 = scmp.ne.s32.totalorder %s139, %s153
      %p155 = scmp.eq.s32.totalorder %s24, 0
      %p156 = por %p154, %p155
      %s158 = sadd.s32 %s157, 1
      %p161 = scmp.eq.s32.totalorder %s18, 1
      %p162 = scmp.ne.s32.totalorder %s157, %s159
      %p163 = scmp.eq.s32.totalorder %s18, 0
      %p164 = por %p162, %p163
      %p165 = scmp.ne.s32.totalorder %s157, %s159
      %p166 = scmp.eq.s32.totalorder %s23, 1
      %p167 = por %p165, %p166
      %p168 = scmp.ne.s32.totalorder %s159, %s160
      %p169 = scmp.eq.s32.totalorder %s23, 0
      %p170 = por %p168, %p169
      %p171 = scmp.ne.s32.totalorder %s159, %s160
      %p172 = scmp.eq.s32.totalorder %s24, 1
      %p173 = por %p171, %p172
      %p175 = scmp.ne.s32.totalorder %s160, %s174
      %p176 = scmp.eq.s32.totalorder %s24, 0
      %p177 = por %p175, %p176
      %s179 = sadd.s32 %s178, 1
      %p182 = scmp.eq.s32.totalorder %s18, 1
      %p183 = scmp.ne.s32.totalorder %s178, %s180
      %p184 = scmp.eq.s32.totalorder %s18, 0
      %p185 = por %p183, %p184
      %p186 = scmp.ne.s32.totalorder %s178, %s180
      %p187 = scmp.eq.s32.totalorder %s23, 1
      %p188 = por %p186, %p187
      %p189 = scmp.ne.s32.totalorder %s180, %s181
      %p190 = scmp.eq.s32.totalorder %s23, 0
      %p191 = por %p189, %p190
      %p192 = scmp.ne.s32.totalorder %s180, %s181
      %p193 = scmp.eq.s32.totalorder %s24, 1
      %p194 = por %p192, %p193
      %p196 = scmp.ne.s32.totalorder %s181, %s195
      %p197 = scmp.eq.s32.totalorder %s24, 0
      %p198 = por %p196, %p197
      %s200 = sadd.s32 %s199, 1
      %p203 = scmp.eq.s32.totalorder %s18, 1
      %p204 = scmp.ne.s32.totalorder %s199, %s201
      %p205 = scmp.eq.s32.totalorder %s18, 0
      %p206 = por %p204, %p205
      %p207 = scmp.ne.s32.totalorder %s199, %s201
      %p208 = scmp.eq.s32.totalorder %s23, 1
      %p209 = por %p207, %p208
      %p210 = scmp.ne.s32.totalorder %s201, %s202
      %p211 = scmp.eq.s32.totalorder %s23, 0
      %p212 = por %p210, %p211
      %p213 = scmp.ne.s32.totalorder %s201, %s202
      %p214 = scmp.eq.s32.totalorder %s24, 1
      %p215 = por %p213, %p214
      %p217 = scmp.ne.s32.totalorder %s202, %s216
      %p218 = scmp.eq.s32.totalorder %s24, 0
      %p219 = por %p217, %p218
      %s220 = ssub.s32 %s18, %s25
      %p221 = scmp.eq.s32.totalorder %s220, 0
      %s223 = sadd.s32 %s222, 1
      %s224 = scalar_select %p221, %s222, %s223
      %p227 = pneg %p221
      %p228 = scmp.eq.s32.totalorder %s18, 1
      %p229 = por %p227, %p228
      %p230 = scmp.ne.s32.totalorder %s222, %s225
      %p231 = scmp.eq.s32.totalorder %s18, 0
      %p232 = por %p230, %p231
      %p233 = scmp.ne.s32.totalorder %s222, %s225
      %p234 = scmp.eq.s32.totalorder %s23, 1
      %p235 = por %p233, %p234
      %p236 = scmp.ne.s32.totalorder %s225, %s226
      %p237 = scmp.eq.s32.totalorder %s23, 0
      %p238 = por %p236, %p237
      %p239 = scmp.ne.s32.totalorder %s225, %s226
      %p240 = scmp.eq.s32.totalorder %s24, 1
      %p241 = por %p239, %p240
      %p243 = scmp.ne.s32.totalorder %s226, %s242
      %p244 = scmp.eq.s32.totalorder %s24, 0
      %p245 = por %p243, %p244
      %p246 = scmp.le.s32.totalorder 1, %s18
      %p247 = scmp.lt.s32.totalorder %s18, 3
      %p248 = pnand %p246, %p247
      %p249 = pneg %p248
      // Predicated region
      $region9: #{sliding_classifier_forward.1} parent=5 // pred_check
        _
      $region10: #{sliding_classifier_forward.1} parent=5 // pred_check_branch
        %251 = sbr.rel (%p248) target = $region12
      $region11: #{sliding_classifier_forward.1} parent=5 // pred_region
        %s252 = ssub.s32 %s18, 1
        // Predicated region
        $region13: #{sliding_classifier_forward.1} parent=11 // pred_check
          %p253 = pneg %p65
        $region14: #{sliding_classifier_forward.1} parent=11 // pred_check_branch
          %255 = sbr.rel (%p253) target = $region16
        $region15: #{sliding_classifier_forward.1} parent=11 // pred_region
          _
        $region16: #{sliding_classifier_forward.1} parent=11 // pred_fallthru
          _
        // Predicated region
        $region17: #{sliding_classifier_forward.1} parent=11 // pred_check
          %p256 = pneg %p86
        $region18: #{sliding_classifier_forward.1} parent=11 // pred_check_branch
          %258 = sbr.rel (%p256) target = $region20
        $region19: #{sliding_classifier_forward.1} parent=11 // pred_region
          _
        $region20: #{sliding_classifier_forward.1} parent=11 // pred_fallthru
          _
        // Predicated region
        $region21: #{sliding_classifier_forward.1} parent=11 // pred_check
          %p259 = pneg %p107
        $region22: #{sliding_classifier_forward.1} parent=11 // pred_check_branch
          %261 = sbr.rel (%p259) target = $region24
        $region23: #{sliding_classifier_forward.1} parent=11 // pred_region
          _
        $region24: #{sliding_classifier_forward.1} parent=11 // pred_fallthru
          _
        // Predicated region
        $region25: #{sliding_classifier_forward.1} parent=11 // pred_check
          %p262 = pneg %p128
        $region26: #{sliding_classifier_forward.1} parent=11 // pred_check_branch
          %264 = sbr.rel (%p262) target = $region28
        $region27: #{sliding_classifier_forward.1} parent=11 // pred_region
          _
        $region28: #{sliding_classifier_forward.1} parent=11 // pred_fallthru
          _
        // Predicated region
        $region29: #{sliding_classifier_forward.1} parent=11 // pred_check
          %p265 = pneg %p149
        $region30: #{sliding_classifier_forward.1} parent=11 // pred_check_branch
          %267 = sbr.rel (%p265) target = $region32
        $region31: #{sliding_classifier_forward.1} parent=11 // pred_region
          _
        $region32: #{sliding_classifier_forward.1} parent=11 // pred_fallthru
          _
        // Predicated region
        $region33: #{sliding_classifier_forward.1} parent=11 // pred_check
          %p268 = pneg %p170
        $region34: #{sliding_classifier_forward.1} parent=11 // pred_check_branch
          %270 = sbr.rel (%p268) target = $region36
        $region35: #{sliding_classifier_forward.1} parent=11 // pred_region
          _
        $region36: #{sliding_classifier_forward.1} parent=11 // pred_fallthru
          _
        // Predicated region
        $region37: #{sliding_classifier_forward.1} parent=11 // pred_check
          %p271 = pneg %p191
        $region38: #{sliding_classifier_forward.1} parent=11 // pred_check_branch
          %273 = sbr.rel (%p271) target = $region40
        $region39: #{sliding_classifier_forward.1} parent=11 // pred_region
          _
        $region40: #{sliding_classifier_forward.1} parent=11 // pred_fallthru
          _
        // Predicated region
        $region41: #{sliding_classifier_forward.1} parent=11 // pred_check
          %p274 = pneg %p212
        $region42: #{sliding_classifier_forward.1} parent=11 // pred_check_branch
          %276 = sbr.rel (%p274) target = $region44
        $region43: #{sliding_classifier_forward.1} parent=11 // pred_region
          _
        $region44: #{sliding_classifier_forward.1} parent=11 // pred_fallthru
          _
      $region12: #{sliding_classifier_forward.1} parent=5 // pred_fallthru
        _
      %p277 = scmp.lt.s32.totalorder %s18, 2
      // Predicated region
      $region45: #{sliding_classifier_forward.1} parent=5 // pred_check
        %p278 = pneg %p277
      $region46: #{sliding_classifier_forward.1} parent=5 // pred_check_branch
        %280 = sbr.rel (%p278) target = $region48
      $region47: #{sliding_classifier_forward.1} parent=5 // pred_region
        // Predicated region
        $region49: #{sliding_classifier_forward.1} parent=47 // pred_check
          %p281 = pneg %p38
        $region50: #{sliding_classifier_forward.1} parent=47 // pred_check_branch
          %283 = sbr.rel (%p281) target = $region52
        $region51: #{sliding_classifier_forward.1} parent=47 // pred_region
          %s284 = smul.u32 13, %s18
          %s285 = ssub.s32 25, %s284
          %p286 = scmp.lt.s32.totalorder %s285, 13
          %s287 = scalar_select %p286, %s285, 13
          %s288 = smul.u32 64, %s287
          %p289 = scmp.lt.s32.totalorder %s284, 24
          %s290 = scalar_select %p289, %s284, 24
          %s291 = smul.addr %s290, 4
          %s292 = scalar_lea.vmem %s0, %s291
          %s293 = smul.u32 13, %s18
          %s294 = ssub.s32 25, %s293
          %p295 = scmp.lt.s32.totalorder %s294, 13
          %s296 = scalar_select %p295, %s294, 13
          %s297 = smul.u32 64, %s296
        $region52: #{sliding_classifier_forward.1} parent=47 // pred_fallthru
          _
      $region48: #{sliding_classifier_forward.1} parent=5 // pred_fallthru
        _
      %p298 = scmp.le.s32.totalorder 1, %s18
      %p299 = scmp.lt.s32.totalorder %s18, 3
      %p300 = pnand %p298, %p299
      %p301 = pneg %p300
      // Predicated region
      $region53: #{sliding_classifier_forward.1} parent=5 // pred_check
        _
      $region54: #{sliding_classifier_forward.1} parent=5 // pred_check_branch
        %303 = sbr.rel (%p300) target = $region56
      $region55: #{sliding_classifier_forward.1} parent=5 // pred_region
        %s304 = ssub.s32 %s18, 1
        %s305 = smul.u32 13, %s23
        %s306 = ssub.s32 25, %s305
        %p307 = scmp.lt.s32.totalorder %s306, 13
        %s308 = scalar_select %p307, %s306, 13
        %s309 = smul.u32 64, %s308
        %p310 = scmp.lt.s32.totalorder %s305, 24
        %s311 = scalar_select %p310, %s305, 24
        %s312 = smul.addr %s311, 4
        %s313 = scalar_lea.vmem %s0, %s312
        %p314 = pneg %p44
        %p315 = pneg %p41
        %p316 = pneg %p65
        %p317 = pneg %p62
        %p318 = pneg %p86
        %p319 = pneg %p83
        %p320 = pneg %p107
        %p321 = pneg %p104
        %p322 = pneg %p128
        %p323 = pneg %p125
        %p324 = pneg %p149
        %p325 = pneg %p146
        %p326 = pneg %p170
        %p327 = pneg %p167
        %p328 = pneg %p191
        %p329 = pneg %p188
        %p330 = pneg %p212
        %p331 = pneg %p209
        %p332 = pneg %p238
        %p333 = pneg %p235
        %s334 = sand.u32 %s225, 1
        %s335 = scalar_lea.sflag [#allocation4], %s334
        %s336 = sand.u32 %s225, 1
        %s337 = smul.addr %s336, 104
        %s338 = scalar_lea.vmem [#allocation3], %s337
        %s339 = smul.u32 13, %s23
        %s340 = ssub.s32 25, %s339
        %p341 = scmp.lt.s32.totalorder %s340, 13
        %s342 = scalar_select %p341, %s340, 13
        %s343 = smul.u32 64, %s342
        %p344 = scmp.lt.s32.totalorder %s339, 24
        %s345 = scalar_select %p344, %s339, 24
        %s346 = smul.addr %s345, 4
        %s347 = scalar_lea.vmem %s0, %s346
        %s348 = smul.u32 13, %s23
        %s349 = ssub.s32 25, %s348
        %p350 = scmp.lt.s32.totalorder %s349, 13
        %s351 = scalar_select %p350, %s349, 13
        %s352 = smul.u32 64, %s351
        %s353 = smul.u32 13, %s23
        %s354 = ssub.s32 25, %s353
        %p355 = scmp.lt.s32.totalorder %s354, 13
        %s356 = scalar_select %p355, %s354, 13
        %s357 = smul.u32 64, %s356
        %s358 = smul.u32 %s357, 2
        %v360 = vld [vmem:[%s347] sm:$0xf]
        %v361 = vld [vmem:[%s347 + $0x4] sm:$0xf]
        %v362 = vld [vmem:[%s347 + $0x8] sm:$0xf]
        %v363 = vld [vmem:[%s347 + $0xc] sm:$0xf]
        %v364 = vld [vmem:[%s347 + $0x10] sm:$0xf]
        %v365 = vld [vmem:[%s347 + $0x14] sm:$0xf]
        %v366 = vld [vmem:[%s347 + $0x18] sm:$0xf]
        %v367 = vld [vmem:[%s347 + $0x1c] sm:$0xf]
        %v368 = vld [vmem:[%s347 + $0x20] sm:$0xf]
        %v369 = vld [vmem:[%s347 + $0x24] sm:$0xf]
        %v370 = vld [vmem:[%s347 + $0x28] sm:$0xf]
        %v371 = vld [vmem:[%s347 + $0x2c] sm:$0xf]
        %v372 = vld [vmem:[%s347 + $0x30] sm:$0xf]
        %v373 = vld [vmem:[%s1] sm:$0xf]
        %v374 = vld [vmem:[%s1 + $0x4] sm:$0xf]
        %v375 = vld [vmem:[%s1 + $0x8] sm:$0xf]
        %v376 = vld [vmem:[%s1 + $0xc] sm:$0xf]
        %v377 = vld [vmem:[%s1 + $0x10] sm:$0xf]
        %v378 = vld [vmem:[%s1 + $0x14] sm:$0xf]
        %v379 = vld [vmem:[%s1 + $0x18] sm:$0xf]
        %v380 = vld [vmem:[%s1 + $0x1c] sm:$0xf]
        %v381 = vld [vmem:[%s1 + $0x20] sm:$0xf]
        %v382 = vld [vmem:[%s1 + $0x24] sm:$0xf]
        %v383 = vld [vmem:[%s1 + $0x28] sm:$0xf]
        %v384 = vld [vmem:[%s1 + $0x2c] sm:$0xf]
        %v385 = vld [vmem:[%s1 + $0x30] sm:$0xf]
        %v386 = vld [vmem:[%s1 + $0x34] sm:$0xf]
        %v387 = vld [vmem:[%s1 + $0x38] sm:$0xf]
        %v388 = vld [vmem:[%s1 + $0x3c] sm:$0xf]
        %v389 = vld [vmem:[%s2] sm:$0x1]
        %v391 = vlaneseq
        %v392 = vshrl.u32 %v391, 7
        %v393 = vsub.s32 0, %v392
        %v394 = vrot.slane %v389, %v393
        %v409 = vunpack.c.l.b16 %v360
        %v410 = vunpack.c.l.b16 %v361
        %v411 = vunpack.c.l.b16 %v362
        %v412 = vunpack.c.l.b16 %v363
        %v413 = vunpack.c.l.b16 %v364
        %v414 = vunpack.c.l.b16 %v365
        %v415 = vunpack.c.l.b16 %v366
        %v416 = vunpack.c.l.b16 %v367
        %v417 = vunpack.c.l.b16 %v368
        %v418 = vunpack.c.l.b16 %v369
        %v419 = vunpack.c.l.b16 %v370
        %v420 = vunpack.c.l.b16 %v371
        %v421 = vunpack.c.l.b16 %v372
        %v422 = vpack.c.b16 %v410, %v409
        %v423 = vpack.c.b16 %v412, %v411
        %v424 = vpack.c.b16 %v414, %v413
        %v425 = vpack.c.b16 %v416, %v415
        %v426 = vpack.c.b16 %v418, %v417
        %v427 = vpack.c.b16 %v420, %v419
        %v428 = vpack.c.b16 %v421, %v421
        %v452 = vunpack.c.l.b16 %v373
        %v453 = vunpack.c.l.b16 %v374
        %v454 = vunpack.c.l.b16 %v375
        %v455 = vunpack.c.l.b16 %v376
        %v456 = vunpack.c.l.b16 %v377
        %v457 = vunpack.c.l.b16 %v378
        %v458 = vunpack.c.l.b16 %v379
        %v459 = vunpack.c.l.b16 %v380
        %v460 = vunpack.c.l.b16 %v381
        %v461 = vunpack.c.l.b16 %v382
        %v462 = vunpack.c.l.b16 %v383
        %v463 = vunpack.c.l.b16 %v384
        %v464 = vunpack.c.l.b16 %v385
        %v465 = vunpack.c.l.b16 %v386
        %v466 = vunpack.c.l.b16 %v387
        %v467 = vunpack.c.l.b16 %v388
        %v468 = vpack.c.b16 %v453, %v452
        %v469 = vpack.c.b16 %v455, %v454
        %v470 = vpack.c.b16 %v457, %v456
        %v471 = vpack.c.b16 %v459, %v458
        %v472 = vpack.c.b16 %v461, %v460
        %v473 = vpack.c.b16 %v463, %v462
        %v474 = vpack.c.b16 %v465, %v464
        %v475 = vpack.c.b16 %v467, %v466
        %484 = vmatprep.subr.bf16.mxu0 0
        %485 = vmatpush1.bf16.msra.mxu0 %v468
        %486 = vmatprep.subr.bf16.mxu0 0
        %487 = vmatpush1.bf16.msra.mxu0 %v469
        %488 = vmatprep.subr.bf16.mxu0 0
        %489 = vmatpush1.bf16.msra.mxu0 %v470
        %490 = vmatprep.subr.bf16.mxu0 0
        %491 = vmatpush1.bf16.msra.mxu0 %v471
        %492 = vmatprep.subr.bf16.mxu0 0
        %493 = vmatpush1.bf16.msra.mxu0 %v472
        %494 = vmatprep.subr.bf16.mxu0 0
        %495 = vmatpush1.bf16.msra.mxu0 %v473
        %496 = vmatprep.subr.bf16.mxu0 0
        %497 = vmatpush1.bf16.msra.mxu0 %v474
        %498 = vmatprep.subr.bf16.mxu0 0
        %499 = vmatpush1.bf16.msra.mxu0 %v475
        %500 = vmatprep.subr.bf16.mxu0 0
        %501 = vmatpush1.bf16.msra.mxu0 0
        %502 = vmatprep.subr.bf16.mxu0 0
        %503 = vmatpush1.bf16.msra.mxu0 0
        %504 = vmatprep.subr.bf16.mxu0 0
        %505 = vmatpush1.bf16.msra.mxu0 0
        %506 = vmatprep.subr.bf16.mxu0 0
        %507 = vmatpush1.bf16.msra.mxu0 0
        %508 = vmatprep.subr.bf16.mxu0 0
        %509 = vmatpush1.bf16.msra.mxu0 0
        %510 = vmatprep.subr.bf16.mxu0 0
        %511 = vmatpush1.bf16.msra.mxu0 0
        %512 = vmatprep.subr.bf16.mxu0 0
        %513 = vmatpush1.bf16.msra.mxu0 0
        %514 = vmatprep.subr.bf16.mxu0 0
        %515 = vmatpush1.bf16.msra.mxu0 0
        %516 = vmatprep.mubr.bf16.mxu0 0
        %517 = vmatmul.mubr.bf16.gmra.mrb[0].mxu0 %v422
        %v518 = vpop.f32.mrb[0].mxu0
        %v519 = vadd.f32 %v394, %v518
        %v520 = vpop.f32.mrb[0].mxu0
        %v521 = vpop.f32.mrb[0].mxu0
        %v522 = vadd.f32 %v394, %v521
        %v523 = vpop.f32.mrb[0].mxu0
        %524 = vmatprep.mubr.bf16.mxu0 0
        %525 = vmatmul.mubr.bf16.gmra.mrb[0].mxu0 %v423
        %v526 = vpop.f32.mrb[0].mxu0
        %v527 = vadd.f32 %v394, %v526
        %v528 = vpop.f32.mrb[0].mxu0
        %v529 = vpop.f32.mrb[0].mxu0
        %v530 = vadd.f32 %v394, %v529
        %v531 = vpop.f32.mrb[0].mxu0
        %532 = vmatprep.mubr.bf16.mxu0 0
        %533 = vmatmul.mubr.bf16.gmra.mrb[0].mxu0 %v424
        %v534 = vpop.f32.mrb[0].mxu0
        %v535 = vadd.f32 %v394, %v534
        %v536 = vpop.f32.mrb[0].mxu0
        %v537 = vpop.f32.mrb[0].mxu0
        %v538 = vadd.f32 %v394, %v537
        %v539 = vpop.f32.mrb[0].mxu0
        %540 = vmatprep.mubr.bf16.mxu0 0
        %541 = vmatmul.mubr.bf16.gmra.mrb[0].mxu0 %v425
        %v542 = vpop.f32.mrb[0].mxu0
        %v543 = vadd.f32 %v394, %v542
        %v544 = vpop.f32.mrb[0].mxu0
        %v545 = vpop.f32.mrb[0].mxu0
        %v546 = vadd.f32 %v394, %v545
        %v547 = vpop.f32.mrb[0].mxu0
        %548 = vmatprep.mubr.bf16.mxu0 0
        %549 = vmatmul.mubr.bf16.gmra.mrb[0].mxu0 %v426
        %v550 = vpop.f32.mrb[0].mxu0
        %v551 = vadd.f32 %v394, %v550
        %v552 = vpop.f32.mrb[0].mxu0
        %v553 = vpop.f32.mrb[0].mxu0
        %v554 = vadd.f32 %v394, %v553
        %v555 = vpop.f32.mrb[0].mxu0
        %556 = vmatprep.mubr.bf16.mxu0 0
        %557 = vmatmul.mubr.bf16.gmra.mrb[0].mxu0 %v427
        %v558 = vpop.f32.mrb[0].mxu0
        %v559 = vadd.f32 %v394, %v558
        %v560 = vpop.f32.mrb[0].mxu0
        %v561 = vpop.f32.mrb[0].mxu0
        %v562 = vadd.f32 %v394, %v561
        %v563 = vpop.f32.mrb[0].mxu0
        %564 = vmatprep.mubr.bf16.mxu0 0
        %565 = vmatmul.mubr.bf16.gmra.mrb[0].mxu0 %v428
        %v566 = vpop.f32.mrb[0].mxu0
        %v567 = vadd.f32 %v394, %v566
        %v568 = vpop.f32.mrb[0].mxu0
        %v569 = vpop.f32.mrb[0].mxu0
        %v570 = vpop.f32.mrb[0].mxu0
        %571 = vdwg.mxu0
        %v572 = vpack.c.bf16 %v522, %v519
        %v573 = vpack.c.bf16 %v530, %v527
        %v574 = vpack.c.bf16 %v538, %v535
        %v575 = vpack.c.bf16 %v546, %v543
        %v576 = vpack.c.bf16 %v554, %v551
        %v577 = vpack.c.bf16 %v562, %v559
        %v578 = vpack.c.bf16 %v567, %v567
        %v586 = vunpack.c.l.b16 %v572
        %v587 = vunpack.c.h.b16 %v572
        %v588 = vunpack.c.l.b16 %v573
        %v589 = vunpack.c.h.b16 %v573
        %v590 = vunpack.c.l.b16 %v574
        %v591 = vunpack.c.h.b16 %v574
        %v592 = vunpack.c.l.b16 %v575
        %v593 = vunpack.c.h.b16 %v575
        %v594 = vunpack.c.l.b16 %v576
        %v595 = vunpack.c.h.b16 %v576
        %v596 = vunpack.c.l.b16 %v577
        %v597 = vunpack.c.h.b16 %v577
        %v598 = vunpack.c.l.b16 %v578
        %v599 = vpack.c.b16 %v586, %v586
        %v600 = vpack.c.b16 %v587, %v587
        %v601 = vpack.c.b16 %v588, %v588
        %v602 = vpack.c.b16 %v589, %v589
        %v603 = vpack.c.b16 %v590, %v590
        %v604 = vpack.c.b16 %v591, %v591
        %v605 = vpack.c.b16 %v592, %v592
        %v606 = vpack.c.b16 %v593, %v593
        %v607 = vpack.c.b16 %v594, %v594
        %v608 = vpack.c.b16 %v595, %v595
        %v609 = vpack.c.b16 %v596, %v596
        %v610 = vpack.c.b16 %v597, %v597
        %v611 = vpack.c.b16 %v598, %v598
        %625 = vst [vmem:[#allocation2] sm:$0xf] %v599
        %626 = vst [vmem:[#allocation2 + $0x4] sm:$0xf] %v600
        %627 = vst [vmem:[#allocation2 + $0x8] sm:$0xf] %v601
        %628 = vst [vmem:[#allocation2 + $0xc] sm:$0xf] %v602
        %629 = vst [vmem:[#allocation2 + $0x10] sm:$0xf] %v603
        %630 = vst [vmem:[#allocation2 + $0x14] sm:$0xf] %v604
        %631 = vst [vmem:[#allocation2 + $0x18] sm:$0xf] %v605
        %632 = vst [vmem:[#allocation2 + $0x1c] sm:$0xf] %v606
        %633 = vst [vmem:[#allocation2 + $0x20] sm:$0xf] %v607
        %634 = vst [vmem:[#allocation2 + $0x24] sm:$0xf] %v608
        %635 = vst [vmem:[#allocation2 + $0x28] sm:$0xf] %v609
        %636 = vst [vmem:[#allocation2 + $0x2c] sm:$0xf] %v610
        %637 = vst [vmem:[#allocation2 + $0x30] sm:$0xf] %v611
        %v638 = vld [vmem:[#allocation2] sm:$0xf]
        %v639 = vld [vmem:[#allocation2 + $0x4] sm:$0xf]
        %v640 = vld [vmem:[#allocation2 + $0x8] sm:$0xf]
        %v641 = vld [vmem:[#allocation2 + $0xc] sm:$0xf]
        %v642 = vld [vmem:[#allocation2 + $0x10] sm:$0xf]
        %v643 = vld [vmem:[#allocation2 + $0x14] sm:$0xf]
        %v644 = vld [vmem:[#allocation2 + $0x18] sm:$0xf]
        %v645 = vld [vmem:[#allocation2 + $0x1c] sm:$0xf]
        %v646 = vld [vmem:[#allocation2 + $0x20] sm:$0xf]
        %v647 = vld [vmem:[#allocation2 + $0x24] sm:$0xf]
        %v648 = vld [vmem:[#allocation2 + $0x28] sm:$0xf]
        %v649 = vld [vmem:[#allocation2 + $0x2c] sm:$0xf]
        %v650 = vld [vmem:[#allocation2 + $0x30] sm:$0xf]
        %v651 = vld [vmem:[%s3] sm:$0xf]
        %v652 = vld [vmem:[%s3 + $0x4] sm:$0xf]
        %v653 = vld [vmem:[%s3 + $0x8] sm:$0xf]
        %v654 = vld [vmem:[%s3 + $0xc] sm:$0xf]
        %v655 = vld [vmem:[%s3 + $0x10] sm:$0xf]
        %v656 = vld [vmem:[%s3 + $0x14] sm:$0xf]
        %v657 = vld [vmem:[%s3 + $0x18] sm:$0xf]
        %v658 = vld [vmem:[%s3 + $0x1c] sm:$0xf]
        %v659 = vld [vmem:[%s3 + $0x20] sm:$0xf]
        %v660 = vld [vmem:[%s3 + $0x24] sm:$0xf]
        %v661 = vld [vmem:[%s3 + $0x28] sm:$0xf]
        %v662 = vld [vmem:[%s3 + $0x2c] sm:$0xf]
        %v663 = vld [vmem:[%s3 + $0x30] sm:$0xf]
        %v664 = vld [vmem:[%s3 + $0x34] sm:$0xf]
        %v665 = vld [vmem:[%s3 + $0x38] sm:$0xf]
        %v666 = vld [vmem:[%s3 + $0x3c] sm:$0xf]
        %v667 = vld [vmem:[%s4] sm:$0x1]
        %v669 = vlaneseq
        %v670 = vshrl.u32 %v669, 7
        %v671 = vsub.s32 0, %v670
        %v672 = vrot.slane %v667, %v671
        %v687 = vunpack.c.l.b16 %v638
        %v688 = vunpack.c.l.b16 %v639
        %v689 = vunpack.c.l.b16 %v640
        %v690 = vunpack.c.l.b16 %v641
        %v691 = vunpack.c.l.b16 %v642
        %v692 = vunpack.c.l.b16 %v643
        %v693 = vunpack.c.l.b16 %v644
        %v694 = vunpack.c.l.b16 %v645
        %v695 = vunpack.c.l.b16 %v646
        %v696 = vunpack.c.l.b16 %v647
        %v697 = vunpack.c.l.b16 %v648
        %v698 = vunpack.c.l.b16 %v649
        %v699 = vunpack.c.l.b16 %v650
        %v700 = vpack.c.b16 %v688, %v687
        %v701 = vpack.c.b16 %v690, %v689
        %v702 = vpack.c.b16 %v692, %v691
        %v703 = vpack.c.b16 %v694, %v693
        %v704 = vpack.c.b16 %v696, %v695
        %v705 = vpack.c.b16 %v698, %v697
        %v706 = vpack.c.b16 %v699, %v699
        %v730 = vunpack.c.l.b16 %v651
        %v731 = vunpack.c.l.b16 %v652
        %v732 = vunpack.c.l.b16 %v653
        %v733 = vunpack.c.l.b16 %v654
        %v734 = vunpack.c.l.b16 %v655
        %v735 = vunpack.c.l.b16 %v656
        %v736 = vunpack.c.l.b16 %v657
        %v737 = vunpack.c.l.b16 %v658
        %v738 = vunpack.c.l.b16 %v659
        %v739 = vunpack.c.l.b16 %v660
        %v740 = vunpack.c.l.b16 %v661
        %v741 = vunpack.c.l.b16 %v662
        %v742 = vunpack.c.l.b16 %v663
        %v743 = vunpack.c.l.b16 %v664
        %v744 = vunpack.c.l.b16 %v665
        %v745 = vunpack.c.l.b16 %v666
        %v746 = vpack.c.b16 %v731, %v730
        %v747 = vpack.c.b16 %v733, %v732
        %v748 = vpack.c.b16 %v735, %v734
        %v749 = vpack.c.b16 %v737, %v736
        %v750 = vpack.c.b16 %v739, %v738
        %v751 = vpack.c.b16 %v741, %v740
        %v752 = vpack.c.b16 %v743, %v742
        %v753 = vpack.c.b16 %v745, %v744
        %762 = vmatprep.subr.bf16.mxu0 0
        %763 = vmatpush1.bf16.msra.mxu0 %v746
        %764 = vmatprep.subr.bf16.mxu0 0
        %765 = vmatpush1.bf16.msra.mxu0 %v747
        %766 = vmatprep.subr.bf16.mxu0 0
        %767 = vmatpush1.bf16.msra.mxu0 %v748
        %768 = vmatprep.subr.bf16.mxu0 0
        %769 = vmatpush1.bf16.msra.mxu0 %v749
        %770 = vmatprep.subr.bf16.mxu0 0
        %771 = vmatpush1.bf16.msra.mxu0 %v750
        %772 = vmatprep.subr.bf16.mxu0 0
        %773 = vmatpush1.bf16.msra.mxu0 %v751
        %774 = vmatprep.subr.bf16.mxu0 0
        %775 = vmatpush1.bf16.msra.mxu0 %v752
        %776 = vmatprep.subr.bf16.mxu0 0
        %777 = vmatpush1.bf16.msra.mxu0 %v753
        %778 = vmatprep.subr.bf16.mxu0 0
        %779 = vmatpush1.bf16.msra.mxu0 0
        %780 = vmatprep.subr.bf16.mxu0 0
        %781 = vmatpush1.bf16.msra.mxu0 0
        %782 = vmatprep.subr.bf16.mxu0 0
        %783 = vmatpush1.bf16.msra.mxu0 0
        %784 = vmatprep.subr.bf16.mxu0 0
        %785 = vmatpush1.bf16.msra.mxu0 0
        %786 = vmatprep.subr.bf16.mxu0 0
        %787 = vmatpush1.bf16.msra.mxu0 0
        %788 = vmatprep.subr.bf16.mxu0 0
        %789 = vmatpush1.bf16.msra.mxu0 0
        %790 = vmatprep.subr.bf16.mxu0 0
        %791 = vmatpush1.bf16.msra.mxu0 0
        %792 = vmatprep.subr.bf16.mxu0 0
        %793 = vmatpush1.bf16.msra.mxu0 0
        %794 = vmatprep.mubr.bf16.mxu0 0
        %795 = vmatmul.mubr.bf16.gmra.mrb[0].mxu0 %v700
        %v796 = vpop.f32.mrb[0].mxu0
        %v797 = vadd.f32 %v672, %v796
        %v798 = vpop.f32.mrb[0].mxu0
        %v799 = vpop.f32.mrb[0].mxu0
        %v800 = vadd.f32 %v672, %v799
        %v801 = vpop.f32.mrb[0].mxu0
        %802 = vmatprep.mubr.bf16.mxu0 0
        %803 = vmatmul.mubr.bf16.gmra.mrb[0].mxu0 %v701
        %v804 = vpop.f32.mrb[0].mxu0
        %v805 = vadd.f32 %v672, %v804
        %v806 = vpop.f32.mrb[0].mxu0
        %v807 = vpop.f32.mrb[0].mxu0
        %v808 = vadd.f32 %v672, %v807
        %v809 = vpop.f32.mrb[0].mxu0
        %810 = vmatprep.mubr.bf16.mxu0 0
        %811 = vmatmul.mubr.bf16.gmra.mrb[0].mxu0 %v702
        %v812 = vpop.f32.mrb[0].mxu0
        %v813 = vadd.f32 %v672, %v812
        %v814 = vpop.f32.mrb[0].mxu0
        %v815 = vpop.f32.mrb[0].mxu0
        %v816 = vadd.f32 %v672, %v815
        %v817 = vpop.f32.mrb[0].mxu0
        %818 = vmatprep.mubr.bf16.mxu0 0
        %819 = vmatmul.mubr.bf16.gmra.mrb[0].mxu0 %v703
        %v820 = vpop.f32.mrb[0].mxu0
        %v821 = vadd.f32 %v672, %v820
        %v822 = vpop.f32.mrb[0].mxu0
        %v823 = vpop.f32.mrb[0].mxu0
        %v824 = vadd.f32 %v672, %v823
        %v825 = vpop.f32.mrb[0].mxu0
        %826 = vmatprep.mubr.bf16.mxu0 0
        %827 = vmatmul.mubr.bf16.gmra.mrb[0].mxu0 %v704
        %v828 = vpop.f32.mrb[0].mxu0
        %v829 = vadd.f32 %v672, %v828
        %v830 = vpop.f32.mrb[0].mxu0
        %v831 = vpop.f32.mrb[0].mxu0
        %v832 = vadd.f32 %v672, %v831
        %v833 = vpop.f32.mrb[0].mxu0
        %834 = vmatprep.mubr.bf16.mxu0 0
        %835 = vmatmul.mubr.bf16.gmra.mrb[0].mxu0 %v705
        %v836 = vpop.f32.mrb[0].mxu0
        %v837 = vadd.f32 %v672, %v836
        %v838 = vpop.f32.mrb[0].mxu0
        %v839 = vpop.f32.mrb[0].mxu0
        %v840 = vadd.f32 %v672, %v839
        %v841 = vpop.f32.mrb[0].mxu0
        %842 = vmatprep.mubr.bf16.mxu0 0
        %843 = vmatmul.mubr.bf16.gmra.mrb[0].mxu0 %v706
        %v844 = vpop.f32.mrb[0].mxu0
        %v845 = vadd.f32 %v672, %v844
        %v846 = vpop.f32.mrb[0].mxu0
        %v847 = vpop.f32.mrb[0].mxu0
        %v848 = vpop.f32.mrb[0].mxu0
        %849 = vdwg.mxu0
        %v850 = vsub.f32 0.0, %v797
        %v851 = vsub.f32 0.0, %v800
        %v852 = vsub.f32 0.0, %v805
        %v853 = vsub.f32 0.0, %v808
        %v854 = vsub.f32 0.0, %v813
        %v855 = vsub.f32 0.0, %v816
        %v856 = vsub.f32 0.0, %v821
        %v857 = vsub.f32 0.0, %v824
        %v858 = vsub.f32 0.0, %v829
        %v859 = vsub.f32 0.0, %v832
        %v860 = vsub.f32 0.0, %v837
        %v861 = vsub.f32 0.0, %v840
        %v862 = vsub.f32 0.0, %v845
        %v863 = vmul.f32 %v850, 1.442695
        %v864 = vpow.pop %v863
        %v865 = vmul.f32 %v851, 1.442695
        %v866 = vpow.pop %v865
        %v867 = vmul.f32 %v852, 1.442695
        %v868 = vpow.pop %v867
        %v869 = vmul.f32 %v853, 1.442695
        %v870 = vpow.pop %v869
        %v871 = vmul.f32 %v854, 1.442695
        %v872 = vpow.pop %v871
        %v873 = vmul.f32 %v855, 1.442695
        %v874 = vpow.pop %v873
        %v875 = vmul.f32 %v856, 1.442695
        %v876 = vpow.pop %v875
        %v877 = vmul.f32 %v857, 1.442695
        %v878 = vpow.pop %v877
        %v879 = vmul.f32 %v858, 1.442695
        %v880 = vpow.pop %v879
        %v881 = vmul.f32 %v859, 1.442695
        %v882 = vpow.pop %v881
        %v883 = vmul.f32 %v860, 1.442695
        %v884 = vpow.pop %v883
        %v885 = vmul.f32 %v861, 1.442695
        %v886 = vpow.pop %v885
        %v887 = vmul.f32 %v862, 1.442695
        %v888 = vpow.pop %v887
        %v889 = vadd.f32 %v864, 1.0
        %v890 = vadd.f32 %v866, 1.0
        %v891 = vadd.f32 %v868, 1.0
        %v892 = vadd.f32 %v870, 1.0
        %v893 = vadd.f32 %v872, 1.0
        %v894 = vadd.f32 %v874, 1.0
        %v895 = vadd.f32 %v876, 1.0
        %v896 = vadd.f32 %v878, 1.0
        %v897 = vadd.f32 %v880, 1.0
        %v898 = vadd.f32 %v882, 1.0
        %v899 = vadd.f32 %v884, 1.0
        %v900 = vadd.f32 %v886, 1.0
        %v901 = vadd.f32 %v888, 1.0
        %v902 = vrcp.pop %v889
        %v903 = vrcp.pop %v890
        %v904 = vrcp.pop %v891
        %v905 = vrcp.pop %v892
        %v906 = vrcp.pop %v893
        %v907 = vrcp.pop %v894
        %v908 = vrcp.pop %v895
        %v909 = vrcp.pop %v896
        %v910 = vrcp.pop %v897
        %v911 = vrcp.pop %v898
        %v912 = vrcp.pop %v899
        %v913 = vrcp.pop %v900
        %v914 = vrcp.pop %v901
        %v915 = vpack.c.bf16 %v903, %v902
        %v916 = vpack.c.bf16 %v905, %v904
        %v917 = vpack.c.bf16 %v907, %v906
        %v918 = vpack.c.bf16 %v909, %v908
        %v919 = vpack.c.bf16 %v911, %v910
        %v920 = vpack.c.bf16 %v913, %v912
        %v921 = vpack.c.bf16 %v914, %v914
        %v929 = vunpack.c.l.b16 %v915
        %v930 = vunpack.c.h.b16 %v915
        %v931 = vunpack.c.l.b16 %v916
        %v932 = vunpack.c.h.b16 %v916
        %v933 = vunpack.c.l.b16 %v917
        %v934 = vunpack.c.h.b16 %v917
        %v935 = vunpack.c.l.b16 %v918
        %v936 = vunpack.c.h.b16 %v918
        %v937 = vunpack.c.l.b16 %v919
        %v938 = vunpack.c.h.b16 %v919
        %v939 = vunpack.c.l.b16 %v920
        %v940 = vunpack.c.h.b16 %v920
        %v941 = vunpack.c.l.b16 %v921
        %v942 = vpack.c.b16 %v929, %v929
        %v943 = vpack.c.b16 %v930, %v930
        %v944 = vpack.c.b16 %v931, %v931
        %v945 = vpack.c.b16 %v932, %v932
        %v946 = vpack.c.b16 %v933, %v933
        %v947 = vpack.c.b16 %v934, %v934
        %v948 = vpack.c.b16 %v935, %v935
        %v949 = vpack.c.b16 %v936, %v936
        %v950 = vpack.c.b16 %v937, %v937
        %v951 = vpack.c.b16 %v938, %v938
        %v952 = vpack.c.b16 %v939, %v939
        %v953 = vpack.c.b16 %v940, %v940
        %v954 = vpack.c.b16 %v941, %v941
        %968 = vst [vmem:[#allocation2] sm:$0xf] %v942
        %969 = vst [vmem:[#allocation2 + $0x4] sm:$0xf] %v943
        %970 = vst [vmem:[#allocation2 + $0x8] sm:$0xf] %v944
        %971 = vst [vmem:[#allocation2 + $0xc] sm:$0xf] %v945
        %972 = vst [vmem:[#allocation2 + $0x10] sm:$0xf] %v946
        %973 = vst [vmem:[#allocation2 + $0x14] sm:$0xf] %v947
        %974 = vst [vmem:[#allocation2 + $0x18] sm:$0xf] %v948
        %975 = vst [vmem:[#allocation2 + $0x1c] sm:$0xf] %v949
        %976 = vst [vmem:[#allocation2 + $0x20] sm:$0xf] %v950
        %977 = vst [vmem:[#allocation2 + $0x24] sm:$0xf] %v951
        %978 = vst [vmem:[#allocation2 + $0x28] sm:$0xf] %v952
        %979 = vst [vmem:[#allocation2 + $0x2c] sm:$0xf] %v953
        %980 = vst [vmem:[#allocation2 + $0x30] sm:$0xf] %v954
        %v981 = vld [vmem:[#allocation2] sm:$0xf]
        %v982 = vld [vmem:[#allocation2 + $0x4] sm:$0xf]
        %v983 = vld [vmem:[#allocation2 + $0x8] sm:$0xf]
        %v984 = vld [vmem:[#allocation2 + $0xc] sm:$0xf]
        %v985 = vld [vmem:[#allocation2 + $0x10] sm:$0xf]
        %v986 = vld [vmem:[#allocation2 + $0x14] sm:$0xf]
        %v987 = vld [vmem:[#allocation2 + $0x18] sm:$0xf]
        %v988 = vld [vmem:[#allocation2 + $0x1c] sm:$0xf]
        %v989 = vld [vmem:[#allocation2 + $0x20] sm:$0xf]
        %v990 = vld [vmem:[#allocation2 + $0x24] sm:$0xf]
        %v991 = vld [vmem:[#allocation2 + $0x28] sm:$0xf]
        %v992 = vld [vmem:[#allocation2 + $0x2c] sm:$0xf]
        %v993 = vld [vmem:[#allocation2 + $0x30] sm:$0xf]
        %v994 = vld [vmem:[%s5] sm:$0xf]
        %v995 = vld [vmem:[%s5 + $0x4] sm:$0xf]
        %v996 = vld [vmem:[%s5 + $0x8] sm:$0xf]
        %v997 = vld [vmem:[%s5 + $0xc] sm:$0xf]
        %v998 = vld [vmem:[%s5 + $0x10] sm:$0xf]
        %v999 = vld [vmem:[%s5 + $0x14] sm:$0xf]
        %v1000 = vld [vmem:[%s5 + $0x18] sm:$0xf]
        %v1001 = vld [vmem:[%s5 + $0x1c] sm:$0xf]
        %v1002 = vld [vmem:[%s5 + $0x20] sm:$0xf]
        %v1003 = vld [vmem:[%s5 + $0x24] sm:$0xf]
        %v1004 = vld [vmem:[%s5 + $0x28] sm:$0xf]
        %v1005 = vld [vmem:[%s5 + $0x2c] sm:$0xf]
        %v1006 = vld [vmem:[%s5 + $0x30] sm:$0xf]
        %v1007 = vld [vmem:[%s5 + $0x34] sm:$0xf]
        %v1008 = vld [vmem:[%s5 + $0x38] sm:$0xf]
        %v1009 = vld [vmem:[%s5 + $0x3c] sm:$0xf]
        %v1010 = vld [vmem:[%s6] sm:$0x1]
        %v1012 = vlaneseq
        %v1013 = vshrl.u32 %v1012, 7
        %v1014 = vsub.s32 0, %v1013
        %v1015 = vrot.slane %v1010, %v1014
        %v1030 = vunpack.c.l.b16 %v981
        %v1031 = vunpack.c.l.b16 %v982
        %v1032 = vunpack.c.l.b16 %v983
        %v1033 = vunpack.c.l.b16 %v984
        %v1034 = vunpack.c.l.b16 %v985
        %v1035 = vunpack.c.l.b16 %v986
        %v1036 = vunpack.c.l.b16 %v987
        %v1037 = vunpack.c.l.b16 %v988
        %v1038 = vunpack.c.l.b16 %v989
        %v1039 = vunpack.c.l.b16 %v990
        %v1040 = vunpack.c.l.b16 %v991
        %v1041 = vunpack.c.l.b16 %v992
        %v1042 = vunpack.c.l.b16 %v993
        %v1043 = vpack.c.b16 %v1031, %v1030
        %v1044 = vpack.c.b16 %v1033, %v1032
        %v1045 = vpack.c.b16 %v1035, %v1034
        %v1046 = vpack.c.b16 %v1037, %v1036
        %v1047 = vpack.c.b16 %v1039, %v1038
        %v1048 = vpack.c.b16 %v1041, %v1040
        %v1049 = vpack.c.b16 %v1042, %v1042
        %v1073 = vunpack.c.l.b16 %v994
        %v1074 = vunpack.c.l.b16 %v995
        %v1075 = vunpack.c.l.b16 %v996
        %v1076 = vunpack.c.l.b16 %v997
        %v1077 = vunpack.c.l.b16 %v998
        %v1078 = vunpack.c.l.b16 %v999
        %v1079 = vunpack.c.l.b16 %v1000
        %v1080 = vunpack.c.l.b16 %v1001
        %v1081 = vunpack.c.l.b16 %v1002
        %v1082 = vunpack.c.l.b16 %v1003
        %v1083 = vunpack.c.l.b16 %v1004
        %v1084 = vunpack.c.l.b16 %v1005
        %v1085 = vunpack.c.l.b16 %v1006
        %v1086 = vunpack.c.l.b16 %v1007
        %v1087 = vunpack.c.l.b16 %v1008
        %v1088 = vunpack.c.l.b16 %v1009
        %v1089 = vpack.c.b16 %v1074, %v1073
        %v1090 = vpack.c.b16 %v1076, %v1075
        %v1091 = vpack.c.b16 %v1078, %v1077
        %v1092 = vpack.c.b16 %v1080, %v1079
        %v1093 = vpack.c.b16 %v1082, %v1081
        %v1094 = vpack.c.b16 %v1084, %v1083
        %v1095 = vpack.c.b16 %v1086, %v1085
        %v1096 = vpack.c.b16 %v1088, %v1087
        %1105 = vmatprep.subr.bf16.mxu0 0
        %1106 = vmatpush1.bf16.msra.mxu0 %v1089
        %1107 = vmatprep.subr.bf16.mxu0 0
        %1108 = vmatpush1.bf16.msra.mxu0 %v1090
        %1109 = vmatprep.subr.bf16.mxu0 0
        %1110 = vmatpush1.bf16.msra.mxu0 %v1091
        %1111 = vmatprep.subr.bf16.mxu0 0
        %1112 = vmatpush1.bf16.msra.mxu0 %v1092
        %1113 = vmatprep.subr.bf16.mxu0 0
        %1114 = vmatpush1.bf16.msra.mxu0 %v1093
        %1115 = vmatprep.subr.bf16.mxu0 0
        %1116 = vmatpush1.bf16.msra.mxu0 %v1094
        %1117 = vmatprep.subr.bf16.mxu0 0
        %1118 = vmatpush1.bf16.msra.mxu0 %v1095
        %1119 = vmatprep.subr.bf16.mxu0 0
        %1120 = vmatpush1.bf16.msra.mxu0 %v1096
        %1121 = vmatprep.subr.bf16.mxu0 0
        %1122 = vmatpush1.bf16.msra.mxu0 0
        %1123 = vmatprep.subr.bf16.mxu0 0
        %1124 = vmatpush1.bf16.msra.mxu0 0
        %1125 = vmatprep.subr.bf16.mxu0 0
        %1126 = vmatpush1.bf16.msra.mxu0 0
        %1127 = vmatprep.subr.bf16.mxu0 0
        %1128 = vmatpush1.bf16.msra.mxu0 0
        %1129 = vmatprep.subr.bf16.mxu0 0
        %1130 = vmatpush1.bf16.msra.mxu0 0
        %1131 = vmatprep.subr.bf16.mxu0 0
        %1132 = vmatpush1.bf16.msra.mxu0 0
        %1133 = vmatprep.subr.bf16.mxu0 0
        %1134 = vmatpush1.bf16.msra.mxu0 0
        %1135 = vmatprep.subr.bf16.mxu0 0
        %1136 = vmatpush1.bf16.msra.mxu0 0
        %1137 = vmatprep.mubr.bf16.mxu0 0
        %1138 = vmatmul.mubr.bf16.gmra.mrb[0].mxu0 %v1043
        %v1139 = vpop.f32.mrb[0].mxu0
        %v1140 = vadd.f32 %v1015, %v1139
        %v1141 = vpop.f32.mrb[0].mxu0
        %v1142 = vpop.f32.mrb[0].mxu0
        %v1143 = vadd.f32 %v1015, %v1142
        %v1144 = vpop.f32.mrb[0].mxu0
        %1145 = vmatprep.mubr.bf16.mxu0 0
        %1146 = vmatmul.mubr.bf16.gmra.mrb[0].mxu0 %v1044
        %v1147 = vpop.f32.mrb[0].mxu0
        %v1148 = vadd.f32 %v1015, %v1147
        %v1149 = vpop.f32.mrb[0].mxu0
        %v1150 = vpop.f32.mrb[0].mxu0
        %v1151 = vadd.f32 %v1015, %v1150
        %v1152 = vpop.f32.mrb[0].mxu0
        %1153 = vmatprep.mubr.bf16.mxu0 0
        %1154 = vmatmul.mubr.bf16.gmra.mrb[0].mxu0 %v1045
        %v1155 = vpop.f32.mrb[0].mxu0
        %v1156 = vadd.f32 %v1015, %v1155
        %v1157 = vpop.f32.mrb[0].mxu0
        %v1158 = vpop.f32.mrb[0].mxu0
        %v1159 = vadd.f32 %v1015, %v1158
        %v1160 = vpop.f32.mrb[0].mxu0
        %1161 = vmatprep.mubr.bf16.mxu0 0
        %1162 = vmatmul.mubr.bf16.gmra.mrb[0].mxu0 %v1046
        %v1163 = vpop.f32.mrb[0].mxu0
        %v1164 = vadd.f32 %v1015, %v1163
        %v1165 = vpop.f32.mrb[0].mxu0
        %v1166 = vpop.f32.mrb[0].mxu0
        %v1167 = vadd.f32 %v1015, %v1166
        %v1168 = vpop.f32.mrb[0].mxu0
        %1169 = vmatprep.mubr.bf16.mxu0 0
        %1170 = vmatmul.mubr.bf16.gmra.mrb[0].mxu0 %v1047
        %v1171 = vpop.f32.mrb[0].mxu0
        %v1172 = vadd.f32 %v1015, %v1171
        %v1173 = vpop.f32.mrb[0].mxu0
        %v1174 = vpop.f32.mrb[0].mxu0
        %v1175 = vadd.f32 %v1015, %v1174
        %v1176 = vpop.f32.mrb[0].mxu0
        %1177 = vmatprep.mubr.bf16.mxu0 0
        %1178 = vmatmul.mubr.bf16.gmra.mrb[0].mxu0 %v1048
        %v1179 = vpop.f32.mrb[0].mxu0
        %v1180 = vadd.f32 %v1015, %v1179
        %v1181 = vpop.f32.mrb[0].mxu0
        %v1182 = vpop.f32.mrb[0].mxu0
        %v1183 = vadd.f32 %v1015, %v1182
        %v1184 = vpop.f32.mrb[0].mxu0
        %1185 = vmatprep.mubr.bf16.mxu0 0
        %1186 = vmatmul.mubr.bf16.gmra.mrb[0].mxu0 %v1049
        %v1187 = vpop.f32.mrb[0].mxu0
        %v1188 = vadd.f32 %v1015, %v1187
        %v1189 = vpop.f32.mrb[0].mxu0
        %v1190 = vpop.f32.mrb[0].mxu0
        %v1191 = vpop.f32.mrb[0].mxu0
        %1192 = vdwg.mxu0
        %v1193 = vsub.f32 0.0, %v1140
        %v1194 = vsub.f32 0.0, %v1143
        %v1195 = vsub.f32 0.0, %v1148
        %v1196 = vsub.f32 0.0, %v1151
        %v1197 = vsub.f32 0.0, %v1156
        %v1198 = vsub.f32 0.0, %v1159
        %v1199 = vsub.f32 0.0, %v1164
        %v1200 = vsub.f32 0.0, %v1167
        %v1201 = vsub.f32 0.0, %v1172
        %v1202 = vsub.f32 0.0, %v1175
        %v1203 = vsub.f32 0.0, %v1180
        %v1204 = vsub.f32 0.0, %v1183
        %v1205 = vsub.f32 0.0, %v1188
        %v1206 = vmul.f32 %v1193, 1.442695
        %v1207 = vpow.pop %v1206
        %v1208 = vmul.f32 %v1194, 1.442695
        %v1209 = vpow.pop %v1208
        %v1210 = vmul.f32 %v1195, 1.442695
        %v1211 = vpow.pop %v1210
        %v1212 = vmul.f32 %v1196, 1.442695
        %v1213 = vpow.pop %v1212
        %v1214 = vmul.f32 %v1197, 1.442695
        %v1215 = vpow.pop %v1214
        %v1216 = vmul.f32 %v1198, 1.442695
        %v1217 = vpow.pop %v1216
        %v1218 = vmul.f32 %v1199, 1.442695
        %v1219 = vpow.pop %v1218
        %v1220 = vmul.f32 %v1200, 1.442695
        %v1221 = vpow.pop %v1220
        %v1222 = vmul.f32 %v1201, 1.442695
        %v1223 = vpow.pop %v1222
        %v1224 = vmul.f32 %v1202, 1.442695
        %v1225 = vpow.pop %v1224
        %v1226 = vmul.f32 %v1203, 1.442695
        %v1227 = vpow.pop %v1226
        %v1228 = vmul.f32 %v1204, 1.442695
        %v1229 = vpow.pop %v1228
        %v1230 = vmul.f32 %v1205, 1.442695
        %v1231 = vpow.pop %v1230
        %v1232 = vadd.f32 %v1207, 1.0
        %v1233 = vadd.f32 %v1209, 1.0
        %v1234 = vadd.f32 %v1211, 1.0
        %v1235 = vadd.f32 %v1213, 1.0
        %v1236 = vadd.f32 %v1215, 1.0
        %v1237 = vadd.f32 %v1217, 1.0
        %v1238 = vadd.f32 %v1219, 1.0
        %v1239 = vadd.f32 %v1221, 1.0
        %v1240 = vadd.f32 %v1223, 1.0
        %v1241 = vadd.f32 %v1225, 1.0
        %v1242 = vadd.f32 %v1227, 1.0
        %v1243 = vadd.f32 %v1229, 1.0
        %v1244 = vadd.f32 %v1231, 1.0
        %v1245 = vrcp.pop %v1232
        %v1246 = vrcp.pop %v1233
        %v1247 = vrcp.pop %v1234
        %v1248 = vrcp.pop %v1235
        %v1249 = vrcp.pop %v1236
        %v1250 = vrcp.pop %v1237
        %v1251 = vrcp.pop %v1238
        %v1252 = vrcp.pop %v1239
        %v1253 = vrcp.pop %v1240
        %v1254 = vrcp.pop %v1241
        %v1255 = vrcp.pop %v1242
        %v1256 = vrcp.pop %v1243
        %v1257 = vrcp.pop %v1244
        %v1258 = vpack.c.bf16 %v1246, %v1245
        %v1259 = vpack.c.bf16 %v1248, %v1247
        %v1260 = vpack.c.bf16 %v1250, %v1249
        %v1261 = vpack.c.bf16 %v1252, %v1251
        %v1262 = vpack.c.bf16 %v1254, %v1253
        %v1263 = vpack.c.bf16 %v1256, %v1255
        %v1264 = vpack.c.bf16 %v1257, %v1257
        %v1272 = vunpack.c.l.b16 %v1258
        %v1273 = vunpack.c.h.b16 %v1258
        %v1274 = vunpack.c.l.b16 %v1259
        %v1275 = vunpack.c.h.b16 %v1259
        %v1276 = vunpack.c.l.b16 %v1260
        %v1277 = vunpack.c.h.b16 %v1260
        %v1278 = vunpack.c.l.b16 %v1261
        %v1279 = vunpack.c.h.b16 %v1261
        %v1280 = vunpack.c.l.b16 %v1262
        %v1281 = vunpack.c.h.b16 %v1262
        %v1282 = vunpack.c.l.b16 %v1263
        %v1283 = vunpack.c.h.b16 %v1263
        %v1284 = vunpack.c.l.b16 %v1264
        %v1285 = vpack.c.b16 %v1272, %v1272
        %v1286 = vpack.c.b16 %v1273, %v1273
        %v1287 = vpack.c.b16 %v1274, %v1274
        %v1288 = vpack.c.b16 %v1275, %v1275
        %v1289 = vpack.c.b16 %v1276, %v1276
        %v1290 = vpack.c.b16 %v1277, %v1277
        %v1291 = vpack.c.b16 %v1278, %v1278
        %v1292 = vpack.c.b16 %v1279, %v1279
        %v1293 = vpack.c.b16 %v1280, %v1280
        %v1294 = vpack.c.b16 %v1281, %v1281
        %v1295 = vpack.c.b16 %v1282, %v1282
        %v1296 = vpack.c.b16 %v1283, %v1283
        %v1297 = vpack.c.b16 %v1284, %v1284
        %1311 = vst [vmem:[#allocation2] sm:$0xf] %v1285
        %1312 = vst [vmem:[#allocation2 + $0x4] sm:$0xf] %v1286
        %1313 = vst [vmem:[#allocation2 + $0x8] sm:$0xf] %v1287
        %1314 = vst [vmem:[#allocation2 + $0xc] sm:$0xf] %v1288
        %1315 = vst [vmem:[#allocation2 + $0x10] sm:$0xf] %v1289
        %1316 = vst [vmem:[#allocation2 + $0x14] sm:$0xf] %v1290
        %1317 = vst [vmem:[#allocation2 + $0x18] sm:$0xf] %v1291
        %1318 = vst [vmem:[#allocation2 + $0x1c] sm:$0xf] %v1292
        %1319 = vst [vmem:[#allocation2 + $0x20] sm:$0xf] %v1293
        %1320 = vst [vmem:[#allocation2 + $0x24] sm:$0xf] %v1294
        %1321 = vst [vmem:[#allocation2 + $0x28] sm:$0xf] %v1295
        %1322 = vst [vmem:[#allocation2 + $0x2c] sm:$0xf] %v1296
        %1323 = vst [vmem:[#allocation2 + $0x30] sm:$0xf] %v1297
        %v1324 = vld [vmem:[#allocation2] sm:$0xf]
        %v1325 = vld [vmem:[#allocation2 + $0x4] sm:$0xf]
        %v1326 = vld [vmem:[#allocation2 + $0x8] sm:$0xf]
        %v1327 = vld [vmem:[#allocation2 + $0xc] sm:$0xf]
        %v1328 = vld [vmem:[#allocation2 + $0x10] sm:$0xf]
        %v1329 = vld [vmem:[#allocation2 + $0x14] sm:$0xf]
        %v1330 = vld [vmem:[#allocation2 + $0x18] sm:$0xf]
        %v1331 = vld [vmem:[#allocation2 + $0x1c] sm:$0xf]
        %v1332 = vld [vmem:[#allocation2 + $0x20] sm:$0xf]
        %v1333 = vld [vmem:[#allocation2 + $0x24] sm:$0xf]
        %v1334 = vld [vmem:[#allocation2 + $0x28] sm:$0xf]
        %v1335 = vld [vmem:[#allocation2 + $0x2c] sm:$0xf]
        %v1336 = vld [vmem:[#allocation2 + $0x30] sm:$0xf]
        %v1337 = vld [vmem:[%s7] sm:$0xff]
        %v1338 = vld [vmem:[%s7 + $0x8] sm:$0xff]
        %v1339 = vld [vmem:[%s7 + $0x10] sm:$0xff]
        %v1340 = vld [vmem:[%s7 + $0x18] sm:$0xff]
        %v1341 = vld [vmem:[%s7 + $0x20] sm:$0xff]
        %v1342 = vld [vmem:[%s7 + $0x28] sm:$0xff]
        %v1343 = vld [vmem:[%s7 + $0x30] sm:$0xff]
        %v1344 = vld [vmem:[%s7 + $0x38] sm:$0xff]
        %v1345 = vld [vmem:[%s7 + $0x40] sm:$0xff]
        %v1346 = vld [vmem:[%s7 + $0x48] sm:$0xff]
        %v1347 = vld [vmem:[%s7 + $0x50] sm:$0xff]
        %v1348 = vld [vmem:[%s7 + $0x58] sm:$0xff]
        %v1349 = vld [vmem:[%s7 + $0x60] sm:$0xff]
        %v1350 = vld [vmem:[%s7 + $0x68] sm:$0xff]
        %v1351 = vld [vmem:[%s7 + $0x70] sm:$0xff]
        %v1352 = vld [vmem:[%s7 + $0x78] sm:$0xff]
        %v1353 = vld [vmem:[%s8] sm:$0x3]
        %v1355 = vlaneseq
        %v1356 = vshrl.u32 %v1355, 7
        %v1357 = vsub.s32 0, %v1356
        %v1358 = vrot.slane %v1353, %v1357
        %v1359 = vlaneseq
        %v1360 = vshrl.u32 %v1359, 7
        %v1361 = vsub.s32 1, %v1360
        %v1362 = vrot.slane %v1353, %v1361
        %v1378 = vunpack.c.l.b16 %v1324
        %v1379 = vunpack.c.l.b16 %v1325
        %v1380 = vunpack.c.l.b16 %v1326
        %v1381 = vunpack.c.l.b16 %v1327
        %v1382 = vunpack.c.l.b16 %v1328
        %v1383 = vunpack.c.l.b16 %v1329
        %v1384 = vunpack.c.l.b16 %v1330
        %v1385 = vunpack.c.l.b16 %v1331
        %v1386 = vunpack.c.l.b16 %v1332
        %v1387 = vunpack.c.l.b16 %v1333
        %v1388 = vunpack.c.l.b16 %v1334
        %v1389 = vunpack.c.l.b16 %v1335
        %v1390 = vunpack.c.l.b16 %v1336
        %v1391 = vpack.c.b16 %v1379, %v1378
        %v1392 = vpack.c.b16 %v1381, %v1380
        %v1393 = vpack.c.b16 %v1383, %v1382
        %v1394 = vpack.c.b16 %v1385, %v1384
        %v1395 = vpack.c.b16 %v1387, %v1386
        %v1396 = vpack.c.b16 %v1389, %v1388
        %v1397 = vpack.c.b16 %v1390, %v1390
        %v1421 = vunpack.c.l.b16 %v1337
        %v1422 = vunpack.c.h.b16 %v1337
        %v1423 = vunpack.c.l.b16 %v1338
        %v1424 = vunpack.c.h.b16 %v1338
        %v1425 = vunpack.c.l.b16 %v1339
        %v1426 = vunpack.c.h.b16 %v1339
        %v1427 = vunpack.c.l.b16 %v1340
        %v1428 = vunpack.c.h.b16 %v1340
        %v1429 = vunpack.c.l.b16 %v1341
        %v1430 = vunpack.c.h.b16 %v1341
        %v1431 = vunpack.c.l.b16 %v1342
        %v1432 = vunpack.c.h.b16 %v1342
        %v1433 = vunpack.c.l.b16 %v1343
        %v1434 = vunpack.c.h.b16 %v1343
        %v1435 = vunpack.c.l.b16 %v1344
        %v1436 = vunpack.c.h.b16 %v1344
        %v1437 = vunpack.c.l.b16 %v1345
        %v1438 = vunpack.c.h.b16 %v1345
        %v1439 = vunpack.c.l.b16 %v1346
        %v1440 = vunpack.c.h.b16 %v1346
        %v1441 = vunpack.c.l.b16 %v1347
        %v1442 = vunpack.c.h.b16 %v1347
        %v1443 = vunpack.c.l.b16 %v1348
        %v1444 = vunpack.c.h.b16 %v1348
        %v1445 = vunpack.c.l.b16 %v1349
        %v1446 = vunpack.c.h.b16 %v1349
        %v1447 = vunpack.c.l.b16 %v1350
        %v1448 = vunpack.c.h.b16 %v1350
        %v1449 = vunpack.c.l.b16 %v1351
        %v1450 = vunpack.c.h.b16 %v1351
        %v1451 = vunpack.c.l.b16 %v1352
        %v1452 = vunpack.c.h.b16 %v1352
        %v1453 = vpack.c.b16 %v1423, %v1421
        %v1454 = vpack.c.b16 %v1424, %v1422
        %v1455 = vpack.c.b16 %v1427, %v1425
        %v1456 = vpack.c.b16 %v1428, %v1426
        %v1457 = vpack.c.b16 %v1431, %v1429
        %v1458 = vpack.c.b16 %v1432, %v1430
        %v1459 = vpack.c.b16 %v1435, %v1433
        %v1460 = vpack.c.b16 %v1436, %v1434
        %v1461 = vpack.c.b16 %v1439, %v1437
        %v1462 = vpack.c.b16 %v1440, %v1438
        %v1463 = vpack.c.b16 %v1443, %v1441
        %v1464 = vpack.c.b16 %v1444, %v1442
        %v1465 = vpack.c.b16 %v1447, %v1445
        %v1466 = vpack.c.b16 %v1448, %v1446
        %v1467 = vpack.c.b16 %v1451, %v1449
        %v1468 = vpack.c.b16 %v1452, %v1450
        %1485 = vmatprep.subr.bf16.mxu0 %v1454
        %1486 = vmatpush1.bf16.msra.mxu0 %v1453
        %1487 = vmatprep.subr.bf16.mxu0 %v1456
        %1488 = vmatpush1.bf16.msra.mxu0 %v1455
        %1489 = vmatprep.subr.bf16.mxu0 %v1458
        %1490 = vmatpush1.bf16.msra.mxu0 %v1457
        %1491 = vmatprep.subr.bf16.mxu0 %v1460
        %1492 = vmatpush1.bf16.msra.mxu0 %v1459
        %1493 = vmatprep.subr.bf16.mxu0 %v1462
        %1494 = vmatpush1.bf16.msra.mxu0 %v1461
        %1495 = vmatprep.subr.bf16.mxu0 %v1464
        %1496 = vmatpush1.bf16.msra.mxu0 %v1463
        %1497 = vmatprep.subr.bf16.mxu0 %v1466
        %1498 = vmatpush1.bf16.msra.mxu0 %v1465
        %1499 = vmatprep.subr.bf16.mxu0 %v1468
        %1500 = vmatpush1.bf16.msra.mxu0 %v1467
        %1501 = vmatprep.subr.bf16.mxu0 0
        %1502 = vmatpush1.bf16.msra.mxu0 0
        %1503 = vmatprep.subr.bf16.mxu0 0
        %1504 = vmatpush1.bf16.msra.mxu0 0
        %1505 = vmatprep.subr.bf16.mxu0 0
        %1506 = vmatpush1.bf16.msra.mxu0 0
        %1507 = vmatprep.subr.bf16.mxu0 0
        %1508 = vmatpush1.bf16.msra.mxu0 0
        %1509 = vmatprep.subr.bf16.mxu0 0
        %1510 = vmatpush1.bf16.msra.mxu0 0
        %1511 = vmatprep.subr.bf16.mxu0 0
        %1512 = vmatpush1.bf16.msra.mxu0 0
        %1513 = vmatprep.subr.bf16.mxu0 0
        %1514 = vmatpush1.bf16.msra.mxu0 0
        %1515 = vmatprep.subr.bf16.mxu0 0
        %1516 = vmatpush1.bf16.msra.mxu0 0
        %1517 = vmatprep.mubr.bf16.mxu0 0
        %1518 = vmatmul.mubr.bf16.gmra.mrb[0].mxu0 %v1391
        %v1519 = vpop.f32.mrb[0].mxu0
        %v1520 = vadd.f32 %v1358, %v1519
        %v1521 = vpop.f32.mrb[0].mxu0
        %v1522 = vadd.f32 %v1362, %v1521
        %v1523 = vpop.f32.mrb[0].mxu0
        %v1524 = vadd.f32 %v1358, %v1523
        %v1525 = vpop.f32.mrb[0].mxu0
        %v1526 = vadd.f32 %v1362, %v1525
        %1527 = vmatprep.mubr.bf16.mxu0 0
        %1528 = vmatmul.mubr.bf16.gmra.mrb[0].mxu0 %v1392
        %v1529 = vpop.f32.mrb[0].mxu0
        %v1530 = vadd.f32 %v1358, %v1529
        %v1531 = vpop.f32.mrb[0].mxu0
        %v1532 = vadd.f32 %v1362, %v1531
        %v1533 = vpop.f32.mrb[0].mxu0
        %v1534 = vadd.f32 %v1358, %v1533
        %v1535 = vpop.f32.mrb[0].mxu0
        %v1536 = vadd.f32 %v1362, %v1535
        %1537 = vmatprep.mubr.bf16.mxu0 0
        %1538 = vmatmul.mubr.bf16.gmra.mrb[0].mxu0 %v1393
        %v1539 = vpop.f32.mrb[0].mxu0
        %v1540 = vadd.f32 %v1358, %v1539
        %v1541 = vpop.f32.mrb[0].mxu0
        %v1542 = vadd.f32 %v1362, %v1541
        %v1543 = vpop.f32.mrb[0].mxu0
        %v1544 = vadd.f32 %v1358, %v1543
        %v1545 = vpop.f32.mrb[0].mxu0
        %v1546 = vadd.f32 %v1362, %v1545
        %1547 = vmatprep.mubr.bf16.mxu0 0
        %1548 = vmatmul.mubr.bf16.gmra.mrb[0].mxu0 %v1394
        %v1549 = vpop.f32.mrb[0].mxu0
        %v1550 = vadd.f32 %v1358, %v1549
        %v1551 = vpop.f32.mrb[0].mxu0
        %v1552 = vadd.f32 %v1362, %v1551
        %v1553 = vpop.f32.mrb[0].mxu0
        %v1554 = vadd.f32 %v1358, %v1553
        %v1555 = vpop.f32.mrb[0].mxu0
        %v1556 = vadd.f32 %v1362, %v1555
        %1557 = vmatprep.mubr.bf16.mxu0 0
        %1558 = vmatmul.mubr.bf16.gmra.mrb[0].mxu0 %v1395
        %v1559 = vpop.f32.mrb[0].mxu0
        %v1560 = vadd.f32 %v1358, %v1559
        %v1561 = vpop.f32.mrb[0].mxu0
        %v1562 = vadd.f32 %v1362, %v1561
        %v1563 = vpop.f32.mrb[0].mxu0
        %v1564 = vadd.f32 %v1358, %v1563
        %v1565 = vpop.f32.mrb[0].mxu0
        %v1566 = vadd.f32 %v1362, %v1565
        %1567 = vmatprep.mubr.bf16.mxu0 0
        %1568 = vmatmul.mubr.bf16.gmra.mrb[0].mxu0 %v1396
        %v1569 = vpop.f32.mrb[0].mxu0
        %v1570 = vadd.f32 %v1358, %v1569
        %v1571 = vpop.f32.mrb[0].mxu0
        %v1572 = vadd.f32 %v1362, %v1571
        %v1573 = vpop.f32.mrb[0].mxu0
        %v1574 = vadd.f32 %v1358, %v1573
        %v1575 = vpop.f32.mrb[0].mxu0
        %v1576 = vadd.f32 %v1362, %v1575
        %1577 = vmatprep.mubr.bf16.mxu0 0
        %1578 = vmatmul.mubr.bf16.gmra.mrb[0].mxu0 %v1397
        %v1579 = vpop.f32.mrb[0].mxu0
        %v1580 = vadd.f32 %v1358, %v1579
        %v1581 = vpop.f32.mrb[0].mxu0
        %v1582 = vadd.f32 %v1362, %v1581
        %v1583 = vpop.f32.mrb[0].mxu0
        %v1584 = vpop.f32.mrb[0].mxu0
        %1585 = vdwg.mxu0
        %v1586 = vpack.c.bf16 %v1524, %v1520
        %v1587 = vpack.c.bf16 %v1526, %v1522
        %v1588 = vpack.c.bf16 %v1534, %v1530
        %v1589 = vpack.c.bf16 %v1536, %v1532
        %v1590 = vpack.c.bf16 %v1544, %v1540
        %v1591 = vpack.c.bf16 %v1546, %v1542
        %v1592 = vpack.c.bf16 %v1554, %v1550
        %v1593 = vpack.c.bf16 %v1556, %v1552
        %v1594 = vpack.c.bf16 %v1564, %v1560
        %v1595 = vpack.c.bf16 %v1566, %v1562
        %v1596 = vpack.c.bf16 %v1574, %v1570
        %v1597 = vpack.c.bf16 %v1576, %v1572
        %v1598 = vpack.c.bf16 %v1580, %v1580
        %v1599 = vpack.c.bf16 %v1582, %v1582
        %v1614 = vunpack.c.l.b16 %v1586
        %v1615 = vunpack.c.l.b16 %v1587
        %v1616 = vunpack.c.h.b16 %v1586
        %v1617 = vunpack.c.h.b16 %v1587
        %v1618 = vunpack.c.l.b16 %v1588
        %v1619 = vunpack.c.l.b16 %v1589
        %v1620 = vunpack.c.h.b16 %v1588
        %v1621 = vunpack.c.h.b16 %v1589
        %v1622 = vunpack.c.l.b16 %v1590
        %v1623 = vunpack.c.l.b16 %v1591
        %v1624 = vunpack.c.h.b16 %v1590
        %v1625 = vunpack.c.h.b16 %v1591
        %v1626 = vunpack.c.l.b16 %v1592
        %v1627 = vunpack.c.l.b16 %v1593
        %v1628 = vunpack.c.h.b16 %v1592
        %v1629 = vunpack.c.h.b16 %v1593
        %v1630 = vunpack.c.l.b16 %v1594
        %v1631 = vunpack.c.l.b16 %v1595
        %v1632 = vunpack.c.h.b16 %v1594
        %v1633 = vunpack.c.h.b16 %v1595
        %v1634 = vunpack.c.l.b16 %v1596
        %v1635 = vunpack.c.l.b16 %v1597
        %v1636 = vunpack.c.h.b16 %v1596
        %v1637 = vunpack.c.h.b16 %v1597
        %v1638 = vunpack.c.l.b16 %v1598
        %v1639 = vunpack.c.l.b16 %v1599
        %v1640 = vpack.c.b16 %v1615, %v1614
        %v1641 = vpack.c.b16 %v1617, %v1616
        %v1642 = vpack.c.b16 %v1619, %v1618
        %v1643 = vpack.c.b16 %v1621, %v1620
        %v1644 = vpack.c.b16 %v1623, %v1622
        %v1645 = vpack.c.b16 %v1625, %v1624
        %v1646 = vpack.c.b16 %v1627, %v1626
        %v1647 = vpack.c.b16 %v1629, %v1628
        %v1648 = vpack.c.b16 %v1631, %v1630
        %v1649 = vpack.c.b16 %v1633, %v1632
        %v1650 = vpack.c.b16 %v1635, %v1634
        %v1651 = vpack.c.b16 %v1637, %v1636
        %v1652 = vpack.c.b16 %v1639, %v1638
        %1666 = vst [vmem:[%s338] sm:$0xff] %v1640
        %1667 = vst [vmem:[%s338 + $0x8] sm:$0xff] %v1641
        %1668 = vst [vmem:[%s338 + $0x10] sm:$0xff] %v1642
        %1669 = vst [vmem:[%s338 + $0x18] sm:$0xff] %v1643
        %1670 = vst [vmem:[%s338 + $0x20] sm:$0xff] %v1644
        %1671 = vst [vmem:[%s338 + $0x28] sm:$0xff] %v1645
        %1672 = vst [vmem:[%s338 + $0x30] sm:$0xff] %v1646
        %1673 = vst [vmem:[%s338 + $0x38] sm:$0xff] %v1647
        %1674 = vst [vmem:[%s338 + $0x40] sm:$0xff] %v1648
        %1675 = vst [vmem:[%s338 + $0x48] sm:$0xff] %v1649
        %1676 = vst [vmem:[%s338 + $0x50] sm:$0xff] %v1650
        %1677 = vst [vmem:[%s338 + $0x58] sm:$0xff] %v1651
        %1678 = vst [vmem:[%s338 + $0x60] sm:$0xff] %v1652
        %s1679 = sand.u32 %s225, 1
        %s1680 = scalar_lea.sflag [#allocation4], %s1679
        %s1681 = sand.u32 %s225, 1
        %s1682 = smul.addr %s1681, 104
        %s1683 = scalar_lea.vmem [#allocation3], %s1682
        // Predicated region
        $region57: #{sliding_classifier_forward.1} parent=55 // pred_check
          %p1684 = pneg %p235
        $region58: #{sliding_classifier_forward.1} parent=55 // pred_check_branch
          %1686 = sbr.rel (%p1684) target = $region60
        $region59: #{sliding_classifier_forward.1} parent=55 // pred_region
          %s1687 = smul.u32 13, %s23
          %s1688 = ssub.s32 25, %s1687
          %p1689 = scmp.lt.s32.totalorder %s1688, 13
          %s1690 = scalar_select %p1689, %s1688, 13
          %s1691 = smul.u32 64, %s1690
          %s1692 = smul.u32 %s1691, 2
          %s1694 = ssub.s32 1664, %s1692
          %1695 = vsyncadd %s1680, %s1694
          %p1696 = scmp.ne.s32.totalorder 0, %s1692
          %s1697 = smul.addr %s1687, 2
          %s1698 = smul.addr %s1697, 64
          %s1699 = scalar_lea.hbm %s9, %s1698
          %s1700 = smul.u32 8, %s1690
          %s1701 = sshll.u32 %s1683, 4
          %s1702 = int_to_ptr.vmem [resolvable:$true] %s1701
          %s1703 = sshll.u32 %s1700, 4
          %1707 = dma.vmem_to_hbm [thread:$0]  (%p1696), %s1702, %s1703, %s1699, %s1680, 128, 128, 8
        $region60: #{sliding_classifier_forward.1} parent=55 // pred_fallthru
          _
      $region56: #{sliding_classifier_forward.1} parent=5 // pred_fallthru
        _
      %p1708 = scmp.le.s32.totalorder 2, %s18
      // Predicated region
      $region61: #{sliding_classifier_forward.1} parent=5 // pred_check
        %p1709 = pneg %p1708
      $region62: #{sliding_classifier_forward.1} parent=5 // pred_check_branch
        %1711 = sbr.rel (%p1709) target = $region64
      $region63: #{sliding_classifier_forward.1} parent=5 // pred_region
        %s1712 = ssub.s32 %s18, 2
        // Predicated region
        $region65: #{sliding_classifier_forward.1} parent=63 // pred_check
          %p1713 = pneg %p241
        $region66: #{sliding_classifier_forward.1} parent=63 // pred_check_branch
          %1715 = sbr.rel (%p1713) target = $region68
        $region67: #{sliding_classifier_forward.1} parent=63 // pred_region
          %s1716 = sand.u32 %s226, 1
          %s1717 = scalar_lea.sflag [#allocation4], %s1716
          %s1718 = sand.u32 %s226, 1
          %s1719 = smul.addr %s1718, 104
          %s1720 = scalar_lea.vmem [#allocation3], %s1719
          %1721 = dma.done %s1717, 1664
        $region68: #{sliding_classifier_forward.1} parent=63 // pred_fallthru
          _
      $region64: #{sliding_classifier_forward.1} parent=5 // pred_fallthru
        _
    $region6: #{sliding_classifier_forward.1} parent=1 // loop_footer
      %s22 = sadd.s32 1, %s18
    $region7: #{sliding_classifier_forward.1} parent=1 // loop_footer_branch
      %17 = sbr.rel target = $region3
    $region8: #{sliding_classifier_forward.1} parent=1 // loop_exit
      _
    %1722 = vsyncpa [#allocation4], 1
    %s1723 = scalar_lea.sflag [#allocation4], 1
    %1724 = vsyncpa %s1723, 1

</llo_original>
